<compile_context>
chip_gen: v5e
topology: v5e:2x2
jax: 0.10.0
libtpu: 0.0.40
codegen_flags: <defaults>
</compile_context>

<pallas_src>
import jax
import jax.numpy as jnp
from jax.experimental import pallas as pl
from jax.experimental.pallas import tpu as pltpu


def _round_up(x, m):
    return (x + m - 1) // m * m


def _pick_row_tile(ho, wo, target=128):
    """Largest divisor TH of HO with TH*WO <= target (falls back to 1)."""
    best = 1
    for th in range(1, ho + 1):
        if ho % th == 0 and th * wo <= target:
            best = th
    return best


def conv2d_pallas(x_nchw, weight_oihw, bias_vec=None, *, stride=1, dilation=1,
                  compute_dtype=jnp.bfloat16):
    """Matches nn.Conv2d(in, out, k, stride, padding=dilation*(k-1)//2, dilation)."""
    N, CIN, H, W = x_nchw.shape
    COUT, CIN_w, KH, KW = weight_oihw.shape
    assert CIN_w == CIN

    pad_h = dilation * (KH - 1) // 2
    pad_w = dilation * (KW - 1) // 2
    HO = (H + 2 * pad_h - dilation * (KH - 1) - 1) // stride + 1
    WO = (W + 2 * pad_w - dilation * (KW - 1) - 1) // stride + 1
    Hp, Wp = H + 2 * pad_h, W + 2 * pad_w

    out_dtype = x_nchw.dtype
    COUT_PAD = _round_up(COUT, 128)                 # lane-dense output / MXU N
    TCO = 256 if COUT_PAD % 256 == 0 else 128       # Cout tile (v6e/v7x MXU width)
    CT = COUT_PAD // TCO
    TH = _pick_row_tile(HO, WO, target=128)         # rows per grid step
    HT = HO // TH

    # ---- glue: layout conversion, padding, dtype casts (plain JAX) ----
    x_nhwc = jnp.transpose(x_nchw, (0, 2, 3, 1)).astype(compute_dtype)     # NCHW->NHWC
    x_pad = jnp.pad(x_nhwc, ((0, 0), (pad_h, pad_h), (pad_w, pad_w), (0, 0)))
    w_hwio = jnp.transpose(weight_oihw, (2, 3, 1, 0)).astype(compute_dtype)  # OIHW->HWIO
    w_hwio = jnp.pad(w_hwio, ((0, 0), (0, 0), (0, 0), (0, COUT_PAD - COUT)))
    if bias_vec is None:
        bias_vec = jnp.zeros((COUT,), jnp.float32)
    b2d = jnp.pad(bias_vec.astype(jnp.float32), (0, COUT_PAD - COUT)).reshape(1, COUT_PAD)

    # ---- Pallas kernel: the conv hot path ----
    def kernel(x_ref, w_ref, b_ref, o_ref):
        # x_ref: (1, Hp, Wp, Cin) compute_dtype (whole padded image, reused across ht/ct)
        # w_ref: (KH, KW, Cin, TCO) compute_dtype
        # b_ref: (1, TCO) float32
        # o_ref: (1, TH, WO, TCO) out_dtype
        ht = pl.program_id(1)
        h0 = ht * (TH * stride)                      # first input row for this tile
        row_span = (TH - 1) * stride + 1

        # Bias-initialized f32 accumulator over a (TH*WO, TCO) tile.
        acc = jnp.broadcast_to(b_ref[...], (TH * WO, TCO)).astype(jnp.float32)

        # TODO(synk): fold the KW taps into a single deeper matmul (concat the KW
        # shifted patches along Cin, K = KW*Cin) once the lane-concat cost is verified.
        for kh in range(KH):
            rows = x_ref[0, pl.ds(h0 + kh * dilation, row_span), :, :]   # (row_span, Wp, Cin)
            if stride > 1:
                # TODO(synk): pre-split stride phases in glue to avoid strided slices.
                rows = rows[::stride]                                    # (TH, Wp, Cin)
            for kw in range(KW):
                w0 = kw * dilation
                if stride == 1:
                    patch = rows[:, w0:w0 + WO, :]                       # (TH, WO, Cin)
                else:
                    patch = rows[:, w0:w0 + (WO - 1) * stride + 1:stride, :]
                patch2 = patch.reshape(TH * WO, CIN)                     # free: WO % 8 == 0
                acc = acc + jnp.dot(patch2, w_ref[kh, kw],
                                    preferred_element_type=jnp.float32)

        o_ref[0] = acc.reshape(TH, WO, TCO).astype(o_ref.dtype)

    flops = 2 * N * HO * WO * KH * KW * CIN * COUT_PAD
    bytes_accessed = (x_pad.size * jnp.dtype(compute_dtype).itemsize
                      + w_hwio.size * jnp.dtype(compute_dtype).itemsize
                      + b2d.size * 4
                      + N * HO * WO * COUT_PAD * jnp.dtype(out_dtype).itemsize)
    cost = pl.CostEstimate(flops=flops, transcendentals=0,
                           bytes_accessed=bytes_accessed)

    # TODO(synk): for very large feature maps on v7x (64 MiB VMEM), band the input
    # BlockSpec over H (halo rows) instead of keeping the whole image resident.
    out_pad = pl.pallas_call(
        kernel,
        out_shape=jax.ShapeDtypeStruct((N, HO, WO, COUT_PAD), out_dtype),
        grid_spec=pltpu.PrefetchScalarGridSpec(
            num_scalar_prefetch=0,
            grid=(N, HT, CT),
            in_specs=[
                pl.BlockSpec((1, Hp, Wp, CIN), lambda n, ht, ct: (n, 0, 0, 0)),
                pl.BlockSpec((KH, KW, CIN, TCO), lambda n, ht, ct: (0, 0, 0, ct)),
                pl.BlockSpec((1, TCO), lambda n, ht, ct: (0, ct)),
            ],
            out_specs=pl.BlockSpec((1, TH, WO, TCO), lambda n, ht, ct: (n, ht, 0, ct)),
        ),
        compiler_params=pltpu.CompilerParams(
            dimension_semantics=("parallel", "parallel", "parallel"),
            vmem_limit_bytes=32 * 1024 * 1024),
        cost_estimate=cost,
    )(x_pad, w_hwio, b2d)

    out_nhwc = out_pad[..., :COUT]                                       # drop Cout pad
    return jnp.transpose(out_nhwc, (0, 3, 1, 2))                         # NHWC -> NCHW


if __name__ == "__main__":
    # _conv_(in_channels=4, out_channels=8, kernel_size=3, stride=1, dilation=1, bias=True)
    IN_CH, OUT_CH, K, STRIDE, DIL = 4, 8, 3, 1, 1
    USE_BIAS = True
    N, H, W = 2, 16, 16

    key = jax.random.PRNGKey(0)
    kx, kw, kb = jax.random.split(key, 3)
    x = jax.random.normal(kx, (N, IN_CH, H, W), jnp.float32)

    # Deterministic xavier_uniform-style weight init (as in initialize_weights()).
    fan_in, fan_out = IN_CH * K * K, OUT_CH * K * K
    limit = (6.0 / (fan_in + fan_out)) ** 0.5
    weight = jax.random.uniform(kw, (OUT_CH, IN_CH, K, K), jnp.float32, -limit, limit)
    # initialize_weights() zeros the bias; use a small random bias here to exercise the add.
    bias = (0.1 * jax.random.normal(kb, (OUT_CH,), jnp.float32)) if USE_BIAS \
        else jnp.zeros((OUT_CH,), jnp.float32)

    out = conv2d_pallas(x, weight, bias, stride=STRIDE, dilation=DIL)
    out = jax.block_until_ready(out)

    # Reference check against XLA's conv (f32). Kernel uses bf16 operands with f32
    # accumulation, so compare with a bf16-appropriate tolerance.
    pad = DIL * (K - 1) // 2
    ref = jax.lax.conv_general_dilated(
        x, weight, window_strides=(STRIDE, STRIDE),
        padding=[(pad, pad), (pad, pad)], rhs_dilation=(DIL, DIL),
        dimension_numbers=("NCHW", "OIHW", "NCHW"))
    ref = ref + bias[None, :, None, None]
    assert out.shape == ref.shape == (N, OUT_CH, H, W), (out.shape, ref.shape)
    assert jnp.allclose(out, ref, atol=2e-2, rtol=2e-2), \
        float(jnp.max(jnp.abs(out - ref)))

    print("KERNEL_OK")
</pallas_src>

<mosaic_0001>
module attributes {stable_mosaic.version = 11 : i64} {
  func.func @kernel(%arg0: i32, %arg1: i32, %arg2: i32, %arg3: memref<1x18x18x4xbf16, #tpu.memory_space<vmem>>, %arg4: memref<3x3x4x128xbf16, #tpu.memory_space<vmem>>, %arg5: memref<1x128xf32, #tpu.memory_space<vmem>>, %arg6: memref<1x8x16x128xf32, #tpu.memory_space<vmem>>) attributes {dimension_semantics = [#tpu.dimension_semantics<parallel>, #tpu.dimension_semantics<parallel>, #tpu.dimension_semantics<parallel>], iteration_bounds = array<i64: 2, 2, 1>, scalar_prefetch = 0 : i64, scratch_operands = 0 : i64, tpu.core_type = #tpu.core_type<tc>, window_params = [{transform_indices = @transform_0, window_bounds = array<i64: 1, 18, 18, 4>}, {transform_indices = @transform_1, window_bounds = array<i64: 3, 3, 4, 128>}, {transform_indices = @transform_2, window_bounds = array<i64: 1, 128>}, {transform_indices = @transform_3, window_bounds = array<i64: 1, 8, 16, 128>}]} {
    %c8_i32 = arith.constant 8 : i32
    %0 = arith.muli %arg1, %c8_i32 : i32
    %c0 = arith.constant 0 : index
    %c0_0 = arith.constant 0 : index
    %1 = vector.load %arg5[%c0, %c0_0] : memref<1x128xf32, #tpu.memory_space<vmem>>, vector<1x128xf32>
    %2 = vector.shape_cast %1 : vector<1x128xf32> to vector<1x128xf32>
    %3 = vector.broadcast %2 : vector<1x128xf32> to vector<128x128xf32>
    %c0_i32 = arith.constant 0 : i32
    %4 = arith.addi %0, %c0_i32 : i32
    %c0_1 = arith.constant 0 : index
    %5 = arith.index_cast %4 : i32 to index
    %c0_2 = arith.constant 0 : index
    %c0_3 = arith.constant 0 : index
    %6 = vector.load %arg3[%c0_1, %5, %c0_2, %c0_3] : memref<1x18x18x4xbf16, #tpu.memory_space<vmem>>, vector<1x8x18x4xbf16>
    %7 = vector.shape_cast %6 : vector<1x8x18x4xbf16> to vector<8x18x4xbf16>
    %8 = vector.extract_strided_slice %7 {offsets = [0, 0, 0], sizes = [8, 16, 4], strides = [1, 1, 1]} : vector<8x18x4xbf16> to vector<8x16x4xbf16>
    %9 = vector.shape_cast %8 : vector<8x16x4xbf16> to vector<128x4xbf16>
    %c0_4 = arith.constant 0 : index
    %c0_5 = arith.constant 0 : index
    %c0_6 = arith.constant 0 : index
    %c0_7 = arith.constant 0 : index
    %10 = vector.load %arg4[%c0_4, %c0_5, %c0_6, %c0_7] : memref<3x3x4x128xbf16, #tpu.memory_space<vmem>>, vector<1x1x4x128xbf16>
    %11 = vector.shape_cast %10 : vector<1x1x4x128xbf16> to vector<4x128xbf16>
    %cst = arith.constant dense<0.000000e+00> : vector<128x128xf32>
    %12 = tpu.matmul %9, %11, %cst {dimension_numbers = #tpu.dot_dimension_numbers<[1], [0], [0], [1], [0, 0, 1, 1], [], []>} : vector<128x4xbf16>, vector<4x128xbf16>, vector<128x128xf32> -> vector<128x128xf32>
    %13 = arith.addf %3, %12 : vector<128x128xf32>
    %14 = vector.extract_strided_slice %7 {offsets = [0, 1, 0], sizes = [8, 16, 4], strides = [1, 1, 1]} : vector<8x18x4xbf16> to vector<8x16x4xbf16>
    %15 = vector.shape_cast %14 : vector<8x16x4xbf16> to vector<128x4xbf16>
    %c0_8 = arith.constant 0 : index
    %c1 = arith.constant 1 : index
    %c0_9 = arith.constant 0 : index
    %c0_10 = arith.constant 0 : index
    %16 = vector.load %arg4[%c0_8, %c1, %c0_9, %c0_10] : memref<3x3x4x128xbf16, #tpu.memory_space<vmem>>, vector<1x1x4x128xbf16>
    %17 = vector.shape_cast %16 : vector<1x1x4x128xbf16> to vector<4x128xbf16>
    %cst_11 = arith.constant dense<0.000000e+00> : vector<128x128xf32>
    %18 = tpu.matmul %15, %17, %cst_11 {dimension_numbers = #tpu.dot_dimension_numbers<[1], [0], [0], [1], [0, 0, 1, 1], [], []>} : vector<128x4xbf16>, vector<4x128xbf16>, vector<128x128xf32> -> vector<128x128xf32>
    %19 = arith.addf %13, %18 : vector<128x128xf32>
    %20 = vector.extract_strided_slice %7 {offsets = [0, 2, 0], sizes = [8, 16, 4], strides = [1, 1, 1]} : vector<8x18x4xbf16> to vector<8x16x4xbf16>
    %21 = vector.shape_cast %20 : vector<8x16x4xbf16> to vector<128x4xbf16>
    %c0_12 = arith.constant 0 : index
    %c2 = arith.constant 2 : index
    %c0_13 = arith.constant 0 : index
    %c0_14 = arith.constant 0 : index
    %22 = vector.load %arg4[%c0_12, %c2, %c0_13, %c0_14] : memref<3x3x4x128xbf16, #tpu.memory_space<vmem>>, vector<1x1x4x128xbf16>
    %23 = vector.shape_cast %22 : vector<1x1x4x128xbf16> to vector<4x128xbf16>
    %cst_15 = arith.constant dense<0.000000e+00> : vector<128x128xf32>
    %24 = tpu.matmul %21, %23, %cst_15 {dimension_numbers = #tpu.dot_dimension_numbers<[1], [0], [0], [1], [0, 0, 1, 1], [], []>} : vector<128x4xbf16>, vector<4x128xbf16>, vector<128x128xf32> -> vector<128x128xf32>
    %25 = arith.addf %19, %24 : vector<128x128xf32>
    %c1_i32 = arith.constant 1 : i32
    %26 = arith.addi %0, %c1_i32 : i32
    %c0_16 = arith.constant 0 : index
    %27 = arith.index_cast %26 : i32 to index
    %c0_17 = arith.constant 0 : index
    %c0_18 = arith.constant 0 : index
    %28 = vector.load %arg3[%c0_16, %27, %c0_17, %c0_18] : memref<1x18x18x4xbf16, #tpu.memory_space<vmem>>, vector<1x8x18x4xbf16>
    %29 = vector.shape_cast %28 : vector<1x8x18x4xbf16> to vector<8x18x4xbf16>
    %30 = vector.extract_strided_slice %29 {offsets = [0, 0, 0], sizes = [8, 16, 4], strides = [1, 1, 1]} : vector<8x18x4xbf16> to vector<8x16x4xbf16>
    %31 = vector.shape_cast %30 : vector<8x16x4xbf16> to vector<128x4xbf16>
    %c1_19 = arith.constant 1 : index
    %c0_20 = arith.constant 0 : index
    %c0_21 = arith.constant 0 : index
    %c0_22 = arith.constant 0 : index
    %32 = vector.load %arg4[%c1_19, %c0_20, %c0_21, %c0_22] : memref<3x3x4x128xbf16, #tpu.memory_space<vmem>>, vector<1x1x4x128xbf16>
    %33 = vector.shape_cast %32 : vector<1x1x4x128xbf16> to vector<4x128xbf16>
    %cst_23 = arith.constant dense<0.000000e+00> : vector<128x128xf32>
    %34 = tpu.matmul %31, %33, %cst_23 {dimension_numbers = #tpu.dot_dimension_numbers<[1], [0], [0], [1], [0, 0, 1, 1], [], []>} : vector<128x4xbf16>, vector<4x128xbf16>, vector<128x128xf32> -> vector<128x128xf32>
    %35 = arith.addf %25, %34 : vector<128x128xf32>
    %36 = vector.extract_strided_slice %29 {offsets = [0, 1, 0], sizes = [8, 16, 4], strides = [1, 1, 1]} : vector<8x18x4xbf16> to vector<8x16x4xbf16>
    %37 = vector.shape_cast %36 : vector<8x16x4xbf16> to vector<128x4xbf16>
    %c1_24 = arith.constant 1 : index
    %c1_25 = arith.constant 1 : index
    %c0_26 = arith.constant 0 : index
    %c0_27 = arith.constant 0 : index
    %38 = vector.load %arg4[%c1_24, %c1_25, %c0_26, %c0_27] : memref<3x3x4x128xbf16, #tpu.memory_space<vmem>>, vector<1x1x4x128xbf16>
    %39 = vector.shape_cast %38 : vector<1x1x4x128xbf16> to vector<4x128xbf16>
    %cst_28 = arith.constant dense<0.000000e+00> : vector<128x128xf32>
    %40 = tpu.matmul %37, %39, %cst_28 {dimension_numbers = #tpu.dot_dimension_numbers<[1], [0], [0], [1], [0, 0, 1, 1], [], []>} : vector<128x4xbf16>, vector<4x128xbf16>, vector<128x128xf32> -> vector<128x128xf32>
    %41 = arith.addf %35, %40 : vector<128x128xf32>
    %42 = vector.extract_strided_slice %29 {offsets = [0, 2, 0], sizes = [8, 16, 4], strides = [1, 1, 1]} : vector<8x18x4xbf16> to vector<8x16x4xbf16>
    %43 = vector.shape_cast %42 : vector<8x16x4xbf16> to vector<128x4xbf16>
    %c1_29 = arith.constant 1 : index
    %c2_30 = arith.constant 2 : index
    %c0_31 = arith.constant 0 : index
    %c0_32 = arith.constant 0 : index
    %44 = vector.load %arg4[%c1_29, %c2_30, %c0_31, %c0_32] : memref<3x3x4x128xbf16, #tpu.memory_space<vmem>>, vector<1x1x4x128xbf16>
    %45 = vector.shape_cast %44 : vector<1x1x4x128xbf16> to vector<4x128xbf16>
    %cst_33 = arith.constant dense<0.000000e+00> : vector<128x128xf32>
    %46 = tpu.matmul %43, %45, %cst_33 {dimension_numbers = #tpu.dot_dimension_numbers<[1], [0], [0], [1], [0, 0, 1, 1], [], []>} : vector<128x4xbf16>, vector<4x128xbf16>, vector<128x128xf32> -> vector<128x128xf32>
    %47 = arith.addf %41, %46 : vector<128x128xf32>
    %c2_i32 = arith.constant 2 : i32
    %48 = arith.addi %0, %c2_i32 : i32
    %c0_34 = arith.constant 0 : index
    %49 = arith.index_cast %48 : i32 to index
    %c0_35 = arith.constant 0 : index
    %c0_36 = arith.constant 0 : index
    %50 = vector.load %arg3[%c0_34, %49, %c0_35, %c0_36] : memref<1x18x18x4xbf16, #tpu.memory_space<vmem>>, vector<1x8x18x4xbf16>
    %51 = vector.shape_cast %50 : vector<1x8x18x4xbf16> to vector<8x18x4xbf16>
    %52 = vector.extract_strided_slice %51 {offsets = [0, 0, 0], sizes = [8, 16, 4], strides = [1, 1, 1]} : vector<8x18x4xbf16> to vector<8x16x4xbf16>
    %53 = vector.shape_cast %52 : vector<8x16x4xbf16> to vector<128x4xbf16>
    %c2_37 = arith.constant 2 : index
    %c0_38 = arith.constant 0 : index
    %c0_39 = arith.constant 0 : index
    %c0_40 = arith.constant 0 : index
    %54 = vector.load %arg4[%c2_37, %c0_38, %c0_39, %c0_40] : memref<3x3x4x128xbf16, #tpu.memory_space<vmem>>, vector<1x1x4x128xbf16>
    %55 = vector.shape_cast %54 : vector<1x1x4x128xbf16> to vector<4x128xbf16>
    %cst_41 = arith.constant dense<0.000000e+00> : vector<128x128xf32>
    %56 = tpu.matmul %53, %55, %cst_41 {dimension_numbers = #tpu.dot_dimension_numbers<[1], [0], [0], [1], [0, 0, 1, 1], [], []>} : vector<128x4xbf16>, vector<4x128xbf16>, vector<128x128xf32> -> vector<128x128xf32>
    %57 = arith.addf %47, %56 : vector<128x128xf32>
    %58 = vector.extract_strided_slice %51 {offsets = [0, 1, 0], sizes = [8, 16, 4], strides = [1, 1, 1]} : vector<8x18x4xbf16> to vector<8x16x4xbf16>
    %59 = vector.shape_cast %58 : vector<8x16x4xbf16> to vector<128x4xbf16>
    %c2_42 = arith.constant 2 : index
    %c1_43 = arith.constant 1 : index
    %c0_44 = arith.constant 0 : index
    %c0_45 = arith.constant 0 : index
    %60 = vector.load %arg4[%c2_42, %c1_43, %c0_44, %c0_45] : memref<3x3x4x128xbf16, #tpu.memory_space<vmem>>, vector<1x1x4x128xbf16>
    %61 = vector.shape_cast %60 : vector<1x1x4x128xbf16> to vector<4x128xbf16>
    %cst_46 = arith.constant dense<0.000000e+00> : vector<128x128xf32>
    %62 = tpu.matmul %59, %61, %cst_46 {dimension_numbers = #tpu.dot_dimension_numbers<[1], [0], [0], [1], [0, 0, 1, 1], [], []>} : vector<128x4xbf16>, vector<4x128xbf16>, vector<128x128xf32> -> vector<128x128xf32>
    %63 = arith.addf %57, %62 : vector<128x128xf32>
    %64 = vector.extract_strided_slice %51 {offsets = [0, 2, 0], sizes = [8, 16, 4], strides = [1, 1, 1]} : vector<8x18x4xbf16> to vector<8x16x4xbf16>
    %65 = vector.shape_cast %64 : vector<8x16x4xbf16> to vector<128x4xbf16>
    %c2_47 = arith.constant 2 : index
    %c2_48 = arith.constant 2 : index
    %c0_49 = arith.constant 0 : index
    %c0_50 = arith.constant 0 : index
    %66 = vector.load %arg4[%c2_47, %c2_48, %c0_49, %c0_50] : memref<3x3x4x128xbf16, #tpu.memory_space<vmem>>, vector<1x1x4x128xbf16>
    %67 = vector.shape_cast %66 : vector<1x1x4x128xbf16> to vector<4x128xbf16>
    %cst_51 = arith.constant dense<0.000000e+00> : vector<128x128xf32>
    %68 = tpu.matmul %65, %67, %cst_51 {dimension_numbers = #tpu.dot_dimension_numbers<[1], [0], [0], [1], [0, 0, 1, 1], [], []>} : vector<128x4xbf16>, vector<4x128xbf16>, vector<128x128xf32> -> vector<128x128xf32>
    %69 = arith.addf %63, %68 : vector<128x128xf32>
    %70 = vector.shape_cast %69 : vector<128x128xf32> to vector<8x16x128xf32>
    %c0_52 = arith.constant 0 : index
    %c0_53 = arith.constant 0 : index
    %c0_54 = arith.constant 0 : index
    %c0_55 = arith.constant 0 : index
    %71 = vector.load %arg6[%c0_52, %c0_53, %c0_54, %c0_55] : memref<1x8x16x128xf32, #tpu.memory_space<vmem>>, vector<1x8x16x128xf32>
    %72 = vector.shape_cast %71 : vector<1x8x16x128xf32> to vector<8x16x128xf32>
    %73 = vector.shape_cast %70 : vector<8x16x128xf32> to vector<1x8x16x128xf32>
    tpu.vector_store %arg6[%c0_52, %c0_53, %c0_54, %c0_55], %73 {strides = array<i32>} : memref<1x8x16x128xf32, #tpu.memory_space<vmem>>, vector<1x8x16x128xf32>,
    return
  }
  func.func @transform_0(%arg0: i32, %arg1: i32, %arg2: i32) -> (i32, i32, i32, i32) {
    %c0_i32 = arith.constant 0 : i32
    %c0_i32_0 = arith.constant 0 : i32
    %c0_i32_1 = arith.constant 0 : i32
    %c0_i32_2 = arith.constant 0 : i32
    return %arg0, %c0_i32, %c0_i32_0, %c0_i32_1 : i32, i32, i32, i32
  }
  func.func @transform_1(%arg0: i32, %arg1: i32, %arg2: i32) -> (i32, i32, i32, i32) {
    %c0_i32 = arith.constant 0 : i32
    %c0_i32_0 = arith.constant 0 : i32
    %c0_i32_1 = arith.constant 0 : i32
    %c0_i32_2 = arith.constant 0 : i32
    return %c0_i32, %c0_i32_0, %c0_i32_1, %arg2 : i32, i32, i32, i32
  }
  func.func @transform_2(%arg0: i32, %arg1: i32, %arg2: i32) -> (i32, i32) {
    %c0_i32 = arith.constant 0 : i32
    %c0_i32_0 = arith.constant 0 : i32
    return %c0_i32, %arg2 : i32, i32
  }
  func.func @transform_3(%arg0: i32, %arg1: i32, %arg2: i32) -> (i32, i32, i32, i32) {
    %c0_i32 = arith.constant 0 : i32
    %c0_i32_0 = arith.constant 0 : i32
    return %arg0, %arg1, %c0_i32, %arg2 : i32, i32, i32, i32
  }
}

</mosaic_0001>

<llo_original>
// kernel: tpu_custom_call.1
$region0: #{tpu_custom_call.1}
  #allocation0 [shape = 'u32[]', space=smem, size = 0x4, offset = 0x4, fixed_abs, tag = 'smem constant byte address 0x4 - core index']
  #allocation1 [shape = 'u32[72,128]{1,0:T(1,128)}', space=vmem, size = 0x9000, scoped, tag = 'internal scratch']
  %s0 = inlined_call_operand.vmem [shape: bf16[2,18,18,4], index: 0, kind: input, shape index: {}]
  %s1 = inlined_call_operand.vmem [shape: bf16[3,3,4,128], index: 1, kind: input, shape index: {}]
  %s2 = inlined_call_operand.vmem [shape: f32[1,128], index: 2, kind: input, shape index: {}]
  %s3 = inlined_call_operand.hbm [shape: f32[2,16,16,128], index: 3, kind: output, shape index: {}]
  %s4 = sld [smem:[#allocation0]]
  $region45: #{tpu_custom_call.1} parent=0
    _
  %s6 = ssub.s32 1, %s4
  %s7 = scalar_select 0, %s6, %s4
  $region1: #{tpu_custom_call.1} parent=0
    #allocation2 [shape = 'u8[131072]{0}', space=vmem, size = 0x20000, scoped, tag = 'output window, operand 0']
    #allocation3 [shape = 's32[2]{0}', space=sflag, size = 0x8, scoped, tag = 'scoped memory for tpu_custom_call.1']
    %8 = vsyncpa [#allocation3], 0
    %s9 = scalar_lea.sflag [#allocation3], 1
    %10 = vsyncpa %s9, 0
    loop: start=0, step=1, limit=6
    $region2: #{tpu_custom_call.1} parent=1 // loop_pre_header
      _
    $region3: #{tpu_custom_call.1} parent=1 // loop_header
      %s12 = sphi 0, %s16
      %p13 = scmp.ge.s32.totalorder %s12, 6
      %s19 = sphi 0, %s38
      %s20 = sphi 0, %s34
      %s21 = sphi 0, %s30
      %s22 = sphi 0, %s19
      %s23 = sphi 0, %s20
      %s24 = sphi 0, %s21
      %s25 = sphi 0, %s22
      %s26 = sphi 0, %s23
      %s27 = sphi 0, %s24
      %s41 = sphi 0, %s43
      %s44 = sphi 0, %s41
      %s45 = sphi 0, %s44
      %s61 = sphi 0, %s45
      %s67 = sphi 0, %s69
      %s70 = sphi 0, %s67
      %s71 = sphi 0, %s70
      %s87 = sphi 0, %s71
      %s93 = sphi 0, %s95
      %s96 = sphi 0, %s93
      %s97 = sphi 0, %s96
      %s113 = sphi 0, %s97
      %s123 = sphi 0, %s125
      %s126 = sphi 0, %s123
      %s127 = sphi 0, %s126
      %s143 = sphi 0, %s127
    $region4: #{tpu_custom_call.1} parent=1 // loop_header_branch
      %15 = sbr.rel (%p13) target = $region8
    $region5: #{tpu_custom_call.1} parent=1 // loop_body
      %s17 = ssub.s32 %s12, 1
      %s18 = ssub.s32 %s12, 2
      %s28 = sadd.s32 1, %s21
      %p29 = scmp.ge.s32.totalorder %s28, 1
      %s30 = scalar_select %p29, 0, %s28
      %s31 = sadd.s32 1, %s20
      %s32 = scalar_select %p29, %s31, %s20
      %p33 = scmp.ge.s32.totalorder %s32, 2
      %s34 = scalar_select %p33, 0, %s32
      %s35 = sadd.s32 1, %s19
      %s36 = scalar_select %p33, %s35, %s19
      %p37 = scmp.ge.s32.totalorder %s36, 2
      %s38 = scalar_select %p37, 0, %s36
      %s39 = ssub.s32 %s19, %s38
      %p40 = scmp.eq.s32.totalorder %s39, 0
      %s42 = sadd.s32 %s41, 1
      %s43 = scalar_select %p40, %s41, %s42
      %p46 = pneg %p40
      %p47 = scmp.eq.s32.totalorder %s12, 3
      %p48 = por %p46, %p47
      %p49 = scmp.ne.s32.totalorder %s41, %s44
      %p50 = scmp.eq.s32.totalorder %s12, 0
      %p51 = por %p49, %p50
      %p52 = scmp.ne.s32.totalorder %s41, %s44
      %p53 = scmp.eq.s32.totalorder %s17, 3
      %p54 = por %p52, %p53
      %p55 = scmp.ne.s32.totalorder %s44, %s45
      %p56 = scmp.eq.s32.totalorder %s17, 0
      %p57 = por %p55, %p56
      %p58 = scmp.ne.s32.totalorder %s44, %s45
      %p59 = scmp.eq.s32.totalorder %s18, 3
      %p60 = por %p58, %p59
      %p62 = scmp.ne.s32.totalorder %s45, %s61
      %p63 = scmp.eq.s32.totalorder %s18, 0
      %p64 = por %p62, %p63
      %s65 = ssub.s32 %s21, %s30
      %p66 = scmp.eq.s32.totalorder %s65, 0
      %s68 = sadd.s32 %s67, 1
      %s69 = scalar_select %p66, %s67, %s68
      %p72 = pneg %p66
      %p73 = scmp.eq.s32.totalorder %s12, 3
      %p74 = por %p72, %p73
      %p75 = scmp.ne.s32.totalorder %s67, %s70
      %p76 = scmp.eq.s32.totalorder %s12, 0
      %p77 = por %p75, %p76
      %p78 = scmp.ne.s32.totalorder %s67, %s70
      %p79 = scmp.eq.s32.totalorder %s17, 3
      %p80 = por %p78, %p79
      %p81 = scmp.ne.s32.totalorder %s70, %s71
      %p82 = scmp.eq.s32.totalorder %s17, 0
      %p83 = por %p81, %p82
      %p84 = scmp.ne.s32.totalorder %s70, %s71
      %p85 = scmp.eq.s32.totalorder %s18, 3
      %p86 = por %p84, %p85
      %p88 = scmp.ne.s32.totalorder %s71, %s87
      %p89 = scmp.eq.s32.totalorder %s18, 0
      %p90 = por %p88, %p89
      %s91 = ssub.s32 %s21, %s30
      %p92 = scmp.eq.s32.totalorder %s91, 0
      %s94 = sadd.s32 %s93, 1
      %s95 = scalar_select %p92, %s93, %s94
      %p98 = pneg %p92
      %p99 = scmp.eq.s32.totalorder %s12, 3
      %p100 = por %p98, %p99
      %p101 = scmp.ne.s32.totalorder %s93, %s96
      %p102 = scmp.eq.s32.totalorder %s12, 0
      %p103 = por %p101, %p102
      %p104 = scmp.ne.s32.totalorder %s93, %s96
      %p105 = scmp.eq.s32.totalorder %s17, 3
      %p106 = por %p104, %p105
      %p107 = scmp.ne.s32.totalorder %s96, %s97
      %p108 = scmp.eq.s32.totalorder %s17, 0
      %p109 = por %p107, %p108
      %p110 = scmp.ne.s32.totalorder %s96, %s97
      %p111 = scmp.eq.s32.totalorder %s18, 3
      %p112 = por %p110, %p111
      %p114 = scmp.ne.s32.totalorder %s97, %s113
      %p115 = scmp.eq.s32.totalorder %s18, 0
      %p116 = por %p114, %p115
      %s117 = ssub.s32 %s19, %s38
      %s118 = ssub.s32 %s20, %s34
      %s119 = sor.u32 %s117, %s118
      %s120 = ssub.s32 %s21, %s30
      %s121 = sor.u32 %s119, %s120
      %p122 = scmp.eq.s32.totalorder %s121, 0
      %s124 = sadd.s32 %s123, 1
      %s125 = scalar_select %p122, %s123, %s124
      %p128 = pneg %p122
      %p129 = scmp.eq.s32.totalorder %s12, 3
      %p130 = por %p128, %p129
      %p131 = scmp.ne.s32.totalorder %s123, %s126
      %p132 = scmp.eq.s32.totalorder %s12, 0
      %p133 = por %p131, %p132
      %p134 = scmp.ne.s32.totalorder %s123, %s126
      %p135 = scmp.eq.s32.totalorder %s17, 3
      %p136 = por %p134, %p135
      %p137 = scmp.ne.s32.totalorder %s126, %s127
      %p138 = scmp.eq.s32.totalorder %s17, 0
      %p139 = por %p137, %p138
      %p140 = scmp.ne.s32.totalorder %s126, %s127
      %p141 = scmp.eq.s32.totalorder %s18, 3
      %p142 = por %p140, %p141
      %p144 = scmp.ne.s32.totalorder %s127, %s143
      %p145 = scmp.eq.s32.totalorder %s18, 0
      %p146 = por %p144, %p145
      %p147 = scmp.le.s32.totalorder 1, %s12
      %p148 = scmp.lt.s32.totalorder %s12, 5
      %p149 = pnand %p147, %p148
      %p150 = pneg %p149
      // Predicated region
      $region9: #{tpu_custom_call.1} parent=5 // pred_check
        _
      $region10: #{tpu_custom_call.1} parent=5 // pred_check_branch
        %152 = sbr.rel (%p149) target = $region12
      $region11: #{tpu_custom_call.1} parent=5 // pred_region
        %s153 = ssub.s32 %s12, 1
        // Predicated region
        $region13: #{tpu_custom_call.1} parent=11 // pred_check
          %p154 = pneg %p83
        $region14: #{tpu_custom_call.1} parent=11 // pred_check_branch
          %156 = sbr.rel (%p154) target = $region16
        $region15: #{tpu_custom_call.1} parent=11 // pred_region
          %p157 = scmp.lt.s32.totalorder %s24, 0
          %s158 = scalar_select %p157, %s24, 0
          %s159 = smul.addr %s158, 2
          %s160 = scalar_lea.vmem %s1, %s159
        $region16: #{tpu_custom_call.1} parent=11 // pred_fallthru
          _
        // Predicated region
        $region17: #{tpu_custom_call.1} parent=11 // pred_check
          %p161 = pneg %p109
        $region18: #{tpu_custom_call.1} parent=11 // pred_check_branch
          %163 = sbr.rel (%p161) target = $region20
        $region19: #{tpu_custom_call.1} parent=11 // pred_region
          %p164 = scmp.lt.s32.totalorder %s24, 0
          %s165 = scalar_select %p164, %s24, 0
          %s166 = scalar_lea.vmem %s2, %s165
        $region20: #{tpu_custom_call.1} parent=11 // pred_fallthru
          _
      $region12: #{tpu_custom_call.1} parent=5 // pred_fallthru
        _
      %p167 = scmp.lt.s32.totalorder %s12, 4
      // Predicated region
      $region21: #{tpu_custom_call.1} parent=5 // pred_check
        %p168 = pneg %p167
      $region22: #{tpu_custom_call.1} parent=5 // pred_check_branch
        %170 = sbr.rel (%p168) target = $region24
      $region23: #{tpu_custom_call.1} parent=5 // pred_region
        // Predicated region
        $region25: #{tpu_custom_call.1} parent=23 // pred_check
          %p171 = pneg %p51
        $region26: #{tpu_custom_call.1} parent=23 // pred_check_branch
          %173 = sbr.rel (%p171) target = $region28
        $region27: #{tpu_custom_call.1} parent=23 // pred_region
          %p174 = scmp.lt.s32.totalorder %s19, 1
          %s175 = scalar_select %p174, %s19, 1
          %s176 = smul.addr %s175, 54
          %s177 = smul.addr %s176, 4
          %s178 = scalar_lea.vmem %s0, %s177
        $region28: #{tpu_custom_call.1} parent=23 // pred_fallthru
          _
      $region24: #{tpu_custom_call.1} parent=5 // pred_fallthru
        _
      %p179 = scmp.le.s32.totalorder 1, %s12
      %p180 = scmp.lt.s32.totalorder %s12, 5
      %p181 = pnand %p179, %p180
      %p182 = pneg %p181
      // Predicated region
      $region29: #{tpu_custom_call.1} parent=5 // pred_check
        _
      $region30: #{tpu_custom_call.1} parent=5 // pred_check_branch
        %184 = sbr.rel (%p181) target = $region32
      $region31: #{tpu_custom_call.1} parent=5 // pred_region
        %s185 = ssub.s32 %s12, 1
        %p186 = scmp.lt.s32.totalorder %s22, 1
        %s187 = scalar_select %p186, %s22, 1
        %s188 = smul.addr %s187, 54
        %s189 = smul.addr %s188, 4
        %s190 = scalar_lea.vmem %s0, %s189
        %p191 = pneg %p57
        %p192 = pneg %p54
        %p193 = scmp.lt.s32.totalorder %s24, 0
        %s194 = scalar_select %p193, %s24, 0
        %s195 = smul.addr %s194, 2
        %s196 = scalar_lea.vmem %s1, %s195
        %p197 = pneg %p83
        %p198 = pneg %p80
        %p199 = scmp.lt.s32.totalorder %s24, 0
        %s200 = scalar_select %p199, %s24, 0
        %s201 = scalar_lea.vmem %s2, %s200
        %p202 = pneg %p109
        %p203 = pneg %p106
        %p204 = pneg %p139
        %p205 = pneg %p136
        %s206 = sand.u32 %s126, 1
        %s207 = scalar_lea.sflag [#allocation3], %s206
        %s208 = sand.u32 %s126, 1
        %s209 = smul.addr %s208, 128
        %s210 = scalar_lea.vmem [#allocation2], %s209
        %p211 = scmp.lt.s32.totalorder %s22, 1
        %s212 = scalar_select %p211, %s22, 1
        %s213 = smul.addr %s212, 54
        %s214 = smul.addr %s213, 4
        %s215 = scalar_lea.vmem %s0, %s214
        %p216 = scmp.lt.s32.totalorder %s24, 0
        %s217 = scalar_select %p216, %s24, 0
        %s218 = smul.addr %s217, 2
        %s219 = scalar_lea.vmem %s1, %s218
        %p220 = scmp.lt.s32.totalorder %s24, 0
        %s221 = scalar_select %p220, %s24, 0
        %s222 = scalar_lea.vmem %s2, %s221
        %s223 = smul.u32 8, %s23
        %s225 = smul.u32 %s23, 8
        %v226 = vld [vmem:[%s222] sm:$0x1]
        %v228 = vperm.slane %v226, 0
        %s230 = smul.u32 %s225, 3
        %s231 = smul.addr %s230, 4
        %s232 = scalar_lea.vmem %s215, %s231
        %v233 = vld [vmem:[%s232] sm:$0xf]
        %v234 = vld [vmem:[%s232 + $0x4] sm:$0xf]
        %v235 = vld [vmem:[%s232 + $0x8] sm:$0x1]
        %v236 = vld [vmem:[%s232 + $0xc] sm:$0xf]
        %v237 = vld [vmem:[%s232 + $0x10] sm:$0xf]
        %v238 = vld [vmem:[%s232 + $0x14] sm:$0x1]
        %v239 = vld [vmem:[%s232 + $0x18] sm:$0xf]
        %v240 = vld [vmem:[%s232 + $0x1c] sm:$0xf]
        %v241 = vld [vmem:[%s232 + $0x20] sm:$0x1]
        %v242 = vld [vmem:[%s232 + $0x24] sm:$0xf]
        %v243 = vld [vmem:[%s232 + $0x28] sm:$0xf]
        %v244 = vld [vmem:[%s232 + $0x2c] sm:$0x1]
        %v245 = vld [vmem:[%s232 + $0x30] sm:$0xf]
        %v246 = vld [vmem:[%s232 + $0x34] sm:$0xf]
        %v247 = vld [vmem:[%s232 + $0x38] sm:$0x1]
        %v248 = vld [vmem:[%s232 + $0x3c] sm:$0xf]
        %v249 = vld [vmem:[%s232 + $0x40] sm:$0xf]
        %v250 = vld [vmem:[%s232 + $0x44] sm:$0x1]
        %v251 = vld [vmem:[%s232 + $0x48] sm:$0xf]
        %v252 = vld [vmem:[%s232 + $0x4c] sm:$0xf]
        %v253 = vld [vmem:[%s232 + $0x50] sm:$0x1]
        %v254 = vld [vmem:[%s232 + $0x54] sm:$0xf]
        %v255 = vld [vmem:[%s232 + $0x58] sm:$0xf]
        %v256 = vld [vmem:[%s232 + $0x5c] sm:$0x1]
        %v257 = vld [vmem:[%s219] sm:$0x3]
        %v274 = vunpack.c.l.b16 %v233
        %v275 = vunpack.c.l.b16 %v234
        %v276 = vunpack.c.l.b16 %v236
        %v277 = vunpack.c.l.b16 %v237
        %v278 = vunpack.c.l.b16 %v239
        %v279 = vunpack.c.l.b16 %v240
        %v280 = vunpack.c.l.b16 %v242
        %v281 = vunpack.c.l.b16 %v243
        %v282 = vunpack.c.l.b16 %v245
        %v283 = vunpack.c.l.b16 %v246
        %v284 = vunpack.c.l.b16 %v248
        %v285 = vunpack.c.l.b16 %v249
        %v286 = vunpack.c.l.b16 %v251
        %v287 = vunpack.c.l.b16 %v252
        %v288 = vunpack.c.l.b16 %v254
        %v289 = vunpack.c.l.b16 %v255
        %v290 = vpack.c.b16 %v275, %v274
        %v291 = vpack.c.b16 %v277, %v276
        %v292 = vpack.c.b16 %v279, %v278
        %v293 = vpack.c.b16 %v281, %v280
        %v294 = vpack.c.b16 %v283, %v282
        %v295 = vpack.c.b16 %v285, %v284
        %v296 = vpack.c.b16 %v287, %v286
        %v297 = vpack.c.b16 %v289, %v288
        %vm298 = vcmask 31744
        %v300 = vsel %vm298, %v290, 0
        %v303 = vsel %vm298, %v291, 0
        %v306 = vsel %vm298, %v292, 0
        %v309 = vsel %vm298, %v293, 0
        %v312 = vsel %vm298, %v294, 0
        %v315 = vsel %vm298, %v295, 0
        %v318 = vsel %vm298, %v296, 0
        %v321 = vsel %vm298, %v297, 0
        %vm323 = vcmask 1041408
        %v325 = vsel %vm323, %v257, 0
        %327 = vmatpush.bf16.msra.mxu0 0
        %328 = vmatpush.bf16.msra.mxu0 0
        %329 = vmatpush.bf16.msra.mxu0 0
        %330 = vmatpush.bf16.msra.mxu0 0
        %331 = vmatpush.bf16.msra.mxu0 0
        %332 = vmatpush.bf16.msra.mxu0 0
        %333 = vmatpush.bf16.msra.mxu0 0
        %334 = vmatpush.bf16.msra.mxu0 %v325
        %335 = vmatmul.bf16.gmra.mxu0 %v300
        %v336 = vpop.f32.mrf.mxu0
        %v337 = vadd.f32 0.0, %v336
        %v338 = vpop.f32.mrf.mxu0
        %v339 = vadd.f32 0.0, %v338
        %340 = vmatmul.bf16.gmra.mxu0 %v303
        %v341 = vpop.f32.mrf.mxu0
        %v342 = vadd.f32 0.0, %v341
        %v343 = vpop.f32.mrf.mxu0
        %v344 = vadd.f32 0.0, %v343
        %345 = vmatmul.bf16.gmra.mxu0 %v306
        %v346 = vpop.f32.mrf.mxu0
        %v347 = vadd.f32 0.0, %v346
        %v348 = vpop.f32.mrf.mxu0
        %v349 = vadd.f32 0.0, %v348
        %350 = vmatmul.bf16.gmra.mxu0 %v309
        %v351 = vpop.f32.mrf.mxu0
        %v352 = vadd.f32 0.0, %v351
        %v353 = vpop.f32.mrf.mxu0
        %v354 = vadd.f32 0.0, %v353
        %355 = vmatmul.bf16.gmra.mxu0 %v312
        %v356 = vpop.f32.mrf.mxu0
        %v357 = vadd.f32 0.0, %v356
        %v358 = vpop.f32.mrf.mxu0
        %v359 = vadd.f32 0.0, %v358
        %360 = vmatmul.bf16.gmra.mxu0 %v315
        %v361 = vpop.f32.mrf.mxu0
        %v362 = vadd.f32 0.0, %v361
        %v363 = vpop.f32.mrf.mxu0
        %v364 = vadd.f32 0.0, %v363
        %365 = vmatmul.bf16.gmra.mxu0 %v318
        %v366 = vpop.f32.mrf.mxu0
        %v367 = vadd.f32 0.0, %v366
        %v368 = vpop.f32.mrf.mxu0
        %v369 = vadd.f32 0.0, %v368
        %370 = vmatmul.bf16.gmra.mxu0 %v321
        %v371 = vpop.f32.mrf.mxu0
        %v372 = vadd.f32 0.0, %v371
        %v373 = vpop.f32.mrf.mxu0
        %v374 = vadd.f32 0.0, %v373
        %375 = vdwg.mxu0
        %v376 = vadd.f32 %v228, %v337
        %v377 = vadd.f32 %v228, %v339
        %v378 = vadd.f32 %v228, %v342
        %v379 = vadd.f32 %v228, %v344
        %v380 = vadd.f32 %v228, %v347
        %v381 = vadd.f32 %v228, %v349
        %v382 = vadd.f32 %v228, %v352
        %v383 = vadd.f32 %v228, %v354
        %v384 = vadd.f32 %v228, %v357
        %v385 = vadd.f32 %v228, %v359
        %v386 = vadd.f32 %v228, %v362
        %v387 = vadd.f32 %v228, %v364
        %v388 = vadd.f32 %v228, %v367
        %v389 = vadd.f32 %v228, %v369
        %v390 = vadd.f32 %v228, %v372
        %v391 = vadd.f32 %v228, %v374
        %vm392 = vsmask.f32 3328
        %vm393 = vsmask.f32 7440
        %vm394 = vmor %vm392, %vm393
        %v396 = vshrl.u32 %v233, 16
        %v398 = vrot.slane %v396, 4
        %v399 = vshll.u32 %v233, 16
        %v401 = vrot.slane %v399, 5
        %v402 = vor.u32 %v398, %v401
        %v403 = vrot.slane %v402, 4
        %v405 = vshll.u32 %v234, 16
        %v407 = vrot.slane %v405, 5
        %v408 = vsel %vm394, %v403, %v407
        %v409 = vshrl.u32 %v234, 16
        %v411 = vrot.slane %v409, 4
        %v412 = vor.u32 %v411, %v407
        %v413 = vrot.slane %v412, 4
        %v415 = vshll.u32 %v235, 16
        %v417 = vrot.slane %v415, 5
        %v418 = vsel %vm394, %v413, %v417
        %v420 = vshrl.u32 %v236, 16
        %v422 = vrot.slane %v420, 4
        %v423 = vshll.u32 %v236, 16
        %v425 = vrot.slane %v423, 5
        %v426 = vor.u32 %v422, %v425
        %v427 = vrot.slane %v426, 4
        %v429 = vshll.u32 %v237, 16
        %v431 = vrot.slane %v429, 5
        %v432 = vsel %vm394, %v427, %v431
        %v433 = vshrl.u32 %v237, 16
        %v435 = vrot.slane %v433, 4
        %v436 = vor.u32 %v435, %v431
        %v437 = vrot.slane %v436, 4
        %v439 = vshll.u32 %v238, 16
        %v441 = vrot.slane %v439, 5
        %v442 = vsel %vm394, %v437, %v441
        %v444 = vshrl.u32 %v239, 16
        %v446 = vrot.slane %v444, 4
        %v447 = vshll.u32 %v239, 16
        %v449 = vrot.slane %v447, 5
        %v450 = vor.u32 %v446, %v449
        %v451 = vrot.slane %v450, 4
        %v453 = vshll.u32 %v240, 16
        %v455 = vrot.slane %v453, 5
        %v456 = vsel %vm394, %v451, %v455
        %v457 = vshrl.u32 %v240, 16
        %v459 = vrot.slane %v457, 4
        %v460 = vor.u32 %v459, %v455
        %v461 = vrot.slane %v460, 4
        %v463 = vshll.u32 %v241, 16
        %v465 = vrot.slane %v463, 5
        %v466 = vsel %vm394, %v461, %v465
        %v468 = vshrl.u32 %v242, 16
        %v470 = vrot.slane %v468, 4
        %v471 = vshll.u32 %v242, 16
        %v473 = vrot.slane %v471, 5
        %v474 = vor.u32 %v470, %v473
        %v475 = vrot.slane %v474, 4
        %v477 = vshll.u32 %v243, 16
        %v479 = vrot.slane %v477, 5
        %v480 = vsel %vm394, %v475, %v479
        %v481 = vshrl.u32 %v243, 16
        %v483 = vrot.slane %v481, 4
        %v484 = vor.u32 %v483, %v479
        %v485 = vrot.slane %v484, 4
        %v487 = vshll.u32 %v244, 16
        %v489 = vrot.slane %v487, 5
        %v490 = vsel %vm394, %v485, %v489
        %v492 = vshrl.u32 %v245, 16
        %v494 = vrot.slane %v492, 4
        %v495 = vshll.u32 %v245, 16
        %v497 = vrot.slane %v495, 5
        %v498 = vor.u32 %v494, %v497
        %v499 = vrot.slane %v498, 4
        %v501 = vshll.u32 %v246, 16
        %v503 = vrot.slane %v501, 5
        %v504 = vsel %vm394, %v499, %v503
        %v505 = vshrl.u32 %v246, 16
        %v507 = vrot.slane %v505, 4
        %v508 = vor.u32 %v507, %v503
        %v509 = vrot.slane %v508, 4
        %v511 = vshll.u32 %v247, 16
        %v513 = vrot.slane %v511, 5
        %v514 = vsel %vm394, %v509, %v513
        %v516 = vshrl.u32 %v248, 16
        %v518 = vrot.slane %v516, 4
        %v519 = vshll.u32 %v248, 16
        %v521 = vrot.slane %v519, 5
        %v522 = vor.u32 %v518, %v521
        %v523 = vrot.slane %v522, 4
        %v525 = vshll.u32 %v249, 16
        %v527 = vrot.slane %v525, 5
        %v528 = vsel %vm394, %v523, %v527
        %v529 = vshrl.u32 %v249, 16
        %v531 = vrot.slane %v529, 4
        %v532 = vor.u32 %v531, %v527
        %v533 = vrot.slane %v532, 4
        %v535 = vshll.u32 %v250, 16
        %v537 = vrot.slane %v535, 5
        %v538 = vsel %vm394, %v533, %v537
        %v540 = vshrl.u32 %v251, 16
        %v542 = vrot.slane %v540, 4
        %v543 = vshll.u32 %v251, 16
        %v545 = vrot.slane %v543, 5
        %v546 = vor.u32 %v542, %v545
        %v547 = vrot.slane %v546, 4
        %v549 = vshll.u32 %v252, 16
        %v551 = vrot.slane %v549, 5
        %v552 = vsel %vm394, %v547, %v551
        %v553 = vshrl.u32 %v252, 16
        %v555 = vrot.slane %v553, 4
        %v556 = vor.u32 %v555, %v551
        %v557 = vrot.slane %v556, 4
        %v559 = vshll.u32 %v253, 16
        %v561 = vrot.slane %v559, 5
        %v562 = vsel %vm394, %v557, %v561
        %v564 = vshrl.u32 %v254, 16
        %v566 = vrot.slane %v564, 4
        %v567 = vshll.u32 %v254, 16
        %v569 = vrot.slane %v567, 5
        %v570 = vor.u32 %v566, %v569
        %v571 = vrot.slane %v570, 4
        %v573 = vshll.u32 %v255, 16
        %v575 = vrot.slane %v573, 5
        %v576 = vsel %vm394, %v571, %v575
        %v577 = vshrl.u32 %v255, 16
        %v579 = vrot.slane %v577, 4
        %v580 = vor.u32 %v579, %v575
        %v581 = vrot.slane %v580, 4
        %v583 = vshll.u32 %v256, 16
        %v585 = vrot.slane %v583, 5
        %v586 = vsel %vm394, %v581, %v585
        %s587 = scalar_lea.vmem %s219, 2
        %v588 = vld [vmem:[%s587] sm:$0x3]
        %v589 = vunpack.c.l.b16 %v408
        %v590 = vunpack.c.l.b16 %v418
        %v591 = vunpack.c.l.b16 %v432
        %v592 = vunpack.c.l.b16 %v442
        %v593 = vunpack.c.l.b16 %v456
        %v594 = vunpack.c.l.b16 %v466
        %v595 = vunpack.c.l.b16 %v480
        %v596 = vunpack.c.l.b16 %v490
        %v597 = vunpack.c.l.b16 %v504
        %v598 = vunpack.c.l.b16 %v514
        %v599 = vunpack.c.l.b16 %v528
        %v600 = vunpack.c.l.b16 %v538
        %v601 = vunpack.c.l.b16 %v552
        %v602 = vunpack.c.l.b16 %v562
        %v603 = vunpack.c.l.b16 %v576
        %v604 = vunpack.c.l.b16 %v586
        %v605 = vpack.c.b16 %v590, %v589
        %v606 = vpack.c.b16 %v592, %v591
        %v607 = vpack.c.b16 %v594, %v593
        %v608 = vpack.c.b16 %v596, %v595
        %v609 = vpack.c.b16 %v598, %v597
        %v610 = vpack.c.b16 %v600, %v599
        %v611 = vpack.c.b16 %v602, %v601
        %v612 = vpack.c.b16 %v604, %v603
        %v614 = vsel %vm298, %v605, 0
        %v617 = vsel %vm298, %v606, 0
        %v620 = vsel %vm298, %v607, 0
        %v623 = vsel %vm298, %v608, 0
        %v626 = vsel %vm298, %v609, 0
        %v629 = vsel %vm298, %v610, 0
        %v632 = vsel %vm298, %v611, 0
        %v635 = vsel %vm298, %v612, 0
        %v638 = vsel %vm323, %v588, 0
        %640 = vmatpush.bf16.msra.mxu0 0
        %641 = vmatpush.bf16.msra.mxu0 0
        %642 = vmatpush.bf16.msra.mxu0 0
        %643 = vmatpush.bf16.msra.mxu0 0
        %644 = vmatpush.bf16.msra.mxu0 0
        %645 = vmatpush.bf16.msra.mxu0 0
        %646 = vmatpush.bf16.msra.mxu0 0
        %647 = vmatpush.bf16.msra.mxu0 %v638
        %648 = vmatmul.bf16.gmra.mxu0 %v614
        %v649 = vpop.f32.mrf.mxu0
        %v650 = vadd.f32 0.0, %v649
        %v651 = vpop.f32.mrf.mxu0
        %v652 = vadd.f32 0.0, %v651
        %653 = vmatmul.bf16.gmra.mxu0 %v617
        %v654 = vpop.f32.mrf.mxu0
        %v655 = vadd.f32 0.0, %v654
        %v656 = vpop.f32.mrf.mxu0
        %v657 = vadd.f32 0.0, %v656
        %658 = vmatmul.bf16.gmra.mxu0 %v620
        %v659 = vpop.f32.mrf.mxu0
        %v660 = vadd.f32 0.0, %v659
        %v661 = vpop.f32.mrf.mxu0
        %v662 = vadd.f32 0.0, %v661
        %663 = vmatmul.bf16.gmra.mxu0 %v623
        %v664 = vpop.f32.mrf.mxu0
        %v665 = vadd.f32 0.0, %v664
        %v666 = vpop.f32.mrf.mxu0
        %v667 = vadd.f32 0.0, %v666
        %668 = vmatmul.bf16.gmra.mxu0 %v626
        %v669 = vpop.f32.mrf.mxu0
        %v670 = vadd.f32 0.0, %v669
        %v671 = vpop.f32.mrf.mxu0
        %v672 = vadd.f32 0.0, %v671
        %673 = vmatmul.bf16.gmra.mxu0 %v629
        %v674 = vpop.f32.mrf.mxu0
        %v675 = vadd.f32 0.0, %v674
        %v676 = vpop.f32.mrf.mxu0
        %v677 = vadd.f32 0.0, %v676
        %678 = vmatmul.bf16.gmra.mxu0 %v632
        %v679 = vpop.f32.mrf.mxu0
        %v680 = vadd.f32 0.0, %v679
        %v681 = vpop.f32.mrf.mxu0
        %v682 = vadd.f32 0.0, %v681
        %683 = vmatmul.bf16.gmra.mxu0 %v635
        %v684 = vpop.f32.mrf.mxu0
        %v685 = vadd.f32 0.0, %v684
        %v686 = vpop.f32.mrf.mxu0
        %v687 = vadd.f32 0.0, %v686
        %688 = vdwg.mxu0
        %v689 = vadd.f32 %v376, %v650
        %v690 = vadd.f32 %v377, %v652
        %v691 = vadd.f32 %v378, %v655
        %v692 = vadd.f32 %v379, %v657
        %v693 = vadd.f32 %v380, %v660
        %v694 = vadd.f32 %v381, %v662
        %v695 = vadd.f32 %v382, %v665
        %v696 = vadd.f32 %v383, %v667
        %v697 = vadd.f32 %v384, %v670
        %v698 = vadd.f32 %v385, %v672
        %v699 = vadd.f32 %v386, %v675
        %v700 = vadd.f32 %v387, %v677
        %v701 = vadd.f32 %v388, %v680
        %v702 = vadd.f32 %v389, %v682
        %v703 = vadd.f32 %v390, %v685
        %v704 = vadd.f32 %v391, %v687
        %vm713 = vcmask 1042432
        %vm714 = vcmask 1046532
        %vm715 = vmor %vm713, %vm714
        %v716 = vrot.slane %v233, 5
        %v717 = vrot.slane %v716, 4
        %v718 = vrot.slane %v234, 5
        %v719 = vsel %vm715, %v717, %v718
        %v720 = vrot.slane %v718, 4
        %v721 = vrot.slane %v235, 5
        %v722 = vsel %vm715, %v720, %v721
        %v723 = vrot.slane %v236, 5
        %v724 = vrot.slane %v723, 4
        %v725 = vrot.slane %v237, 5
        %v726 = vsel %vm715, %v724, %v725
        %v727 = vrot.slane %v725, 4
        %v728 = vrot.slane %v238, 5
        %v729 = vsel %vm715, %v727, %v728
        %v730 = vrot.slane %v239, 5
        %v731 = vrot.slane %v730, 4
        %v732 = vrot.slane %v240, 5
        %v733 = vsel %vm715, %v731, %v732
        %v734 = vrot.slane %v732, 4
        %v735 = vrot.slane %v241, 5
        %v736 = vsel %vm715, %v734, %v735
        %v737 = vrot.slane %v242, 5
        %v738 = vrot.slane %v737, 4
        %v739 = vrot.slane %v243, 5
        %v740 = vsel %vm715, %v738, %v739
        %v741 = vrot.slane %v739, 4
        %v742 = vrot.slane %v244, 5
        %v743 = vsel %vm715, %v741, %v742
        %v744 = vrot.slane %v245, 5
        %v745 = vrot.slane %v744, 4
        %v746 = vrot.slane %v246, 5
        %v747 = vsel %vm715, %v745, %v746
        %v748 = vrot.slane %v746, 4
        %v749 = vrot.slane %v247, 5
        %v750 = vsel %vm715, %v748, %v749
        %v751 = vrot.slane %v248, 5
        %v752 = vrot.slane %v751, 4
        %v753 = vrot.slane %v249, 5
        %v754 = vsel %vm715, %v752, %v753
        %v755 = vrot.slane %v753, 4
        %v756 = vrot.slane %v250, 5
        %v757 = vsel %vm715, %v755, %v756
        %v758 = vrot.slane %v251, 5
        %v759 = vrot.slane %v758, 4
        %v760 = vrot.slane %v252, 5
        %v761 = vsel %vm715, %v759, %v760
        %v762 = vrot.slane %v760, 4
        %v763 = vrot.slane %v253, 5
        %v764 = vsel %vm715, %v762, %v763
        %v765 = vrot.slane %v254, 5
        %v766 = vrot.slane %v765, 4
        %v767 = vrot.slane %v255, 5
        %v768 = vsel %vm715, %v766, %v767
        %v769 = vrot.slane %v767, 4
        %v770 = vrot.slane %v256, 5
        %v771 = vsel %vm715, %v769, %v770
        %s772 = scalar_lea.vmem %s219, 4
        %v773 = vld [vmem:[%s772] sm:$0x3]
        %v774 = vunpack.c.l.b16 %v719
        %v775 = vunpack.c.l.b16 %v722
        %v776 = vunpack.c.l.b16 %v726
        %v777 = vunpack.c.l.b16 %v729
        %v778 = vunpack.c.l.b16 %v733
        %v779 = vunpack.c.l.b16 %v736
        %v780 = vunpack.c.l.b16 %v740
        %v781 = vunpack.c.l.b16 %v743
        %v782 = vunpack.c.l.b16 %v747
        %v783 = vunpack.c.l.b16 %v750
        %v784 = vunpack.c.l.b16 %v754
        %v785 = vunpack.c.l.b16 %v757
        %v786 = vunpack.c.l.b16 %v761
        %v787 = vunpack.c.l.b16 %v764
        %v788 = vunpack.c.l.b16 %v768
        %v789 = vunpack.c.l.b16 %v771
        %v790 = vpack.c.b16 %v775, %v774
        %v791 = vpack.c.b16 %v777, %v776
        %v792 = vpack.c.b16 %v779, %v778
        %v793 = vpack.c.b16 %v781, %v780
        %v794 = vpack.c.b16 %v783, %v782
        %v795 = vpack.c.b16 %v785, %v784
        %v796 = vpack.c.b16 %v787, %v786
        %v797 = vpack.c.b16 %v789, %v788
        %v799 = vsel %vm298, %v790, 0
        %v802 = vsel %vm298, %v791, 0
        %v805 = vsel %vm298, %v792, 0
        %v808 = vsel %vm298, %v793, 0
        %v811 = vsel %vm298, %v794, 0
        %v814 = vsel %vm298, %v795, 0
        %v817 = vsel %vm298, %v796, 0
        %v820 = vsel %vm298, %v797, 0
        %v823 = vsel %vm323, %v773, 0
        %825 = vmatpush.bf16.msra.mxu0 0
        %826 = vmatpush.bf16.msra.mxu0 0
        %827 = vmatpush.bf16.msra.mxu0 0
        %828 = vmatpush.bf16.msra.mxu0 0
        %829 = vmatpush.bf16.msra.mxu0 0
        %830 = vmatpush.bf16.msra.mxu0 0
        %831 = vmatpush.bf16.msra.mxu0 0
        %832 = vmatpush.bf16.msra.mxu0 %v823
        %833 = vmatmul.bf16.gmra.mxu0 %v799
        %v834 = vpop.f32.mrf.mxu0
        %v835 = vadd.f32 0.0, %v834
        %v836 = vpop.f32.mrf.mxu0
        %v837 = vadd.f32 0.0, %v836
        %838 = vmatmul.bf16.gmra.mxu0 %v802
        %v839 = vpop.f32.mrf.mxu0
        %v840 = vadd.f32 0.0, %v839
        %v841 = vpop.f32.mrf.mxu0
        %v842 = vadd.f32 0.0, %v841
        %843 = vmatmul.bf16.gmra.mxu0 %v805
        %v844 = vpop.f32.mrf.mxu0
        %v845 = vadd.f32 0.0, %v844
        %v846 = vpop.f32.mrf.mxu0
        %v847 = vadd.f32 0.0, %v846
        %848 = vmatmul.bf16.gmra.mxu0 %v808
        %v849 = vpop.f32.mrf.mxu0
        %v850 = vadd.f32 0.0, %v849
        %v851 = vpop.f32.mrf.mxu0
        %v852 = vadd.f32 0.0, %v851
        %853 = vmatmul.bf16.gmra.mxu0 %v811
        %v854 = vpop.f32.mrf.mxu0
        %v855 = vadd.f32 0.0, %v854
        %v856 = vpop.f32.mrf.mxu0
        %v857 = vadd.f32 0.0, %v856
        %858 = vmatmul.bf16.gmra.mxu0 %v814
        %v859 = vpop.f32.mrf.mxu0
        %v860 = vadd.f32 0.0, %v859
        %v861 = vpop.f32.mrf.mxu0
        %v862 = vadd.f32 0.0, %v861
        %863 = vmatmul.bf16.gmra.mxu0 %v817
        %v864 = vpop.f32.mrf.mxu0
        %v865 = vadd.f32 0.0, %v864
        %v866 = vpop.f32.mrf.mxu0
        %v867 = vadd.f32 0.0, %v866
        %868 = vmatmul.bf16.gmra.mxu0 %v820
        %v869 = vpop.f32.mrf.mxu0
        %v870 = vadd.f32 0.0, %v869
        %v871 = vpop.f32.mrf.mxu0
        %v872 = vadd.f32 0.0, %v871
        %873 = vdwg.mxu0
        %v874 = vadd.f32 %v689, %v835
        %v875 = vadd.f32 %v690, %v837
        %v876 = vadd.f32 %v691, %v840
        %v877 = vadd.f32 %v692, %v842
        %v878 = vadd.f32 %v693, %v845
        %v879 = vadd.f32 %v694, %v847
        %v880 = vadd.f32 %v695, %v850
        %v881 = vadd.f32 %v696, %v852
        %v882 = vadd.f32 %v697, %v855
        %v883 = vadd.f32 %v698, %v857
        %v884 = vadd.f32 %v699, %v860
        %v885 = vadd.f32 %v700, %v862
        %v886 = vadd.f32 %v701, %v865
        %v887 = vadd.f32 %v702, %v867
        %v888 = vadd.f32 %v703, %v870
        %v889 = vadd.f32 %v704, %v872
        %s890 = sadd.s32 %s225, 1
        %s891 = smul.u32 %s890, 3
        %s892 = smul.addr %s891, 4
        %s893 = scalar_lea.vmem %s215, %s892
        %v894 = vld [vmem:[%s893] sm:$0xf]
        %v895 = vld [vmem:[%s893 + $0x4] sm:$0xf]
        %v896 = vld [vmem:[%s893 + $0x8] sm:$0x1]
        %v897 = vld [vmem:[%s893 + $0xc] sm:$0xf]
        %v898 = vld [vmem:[%s893 + $0x10] sm:$0xf]
        %v899 = vld [vmem:[%s893 + $0x14] sm:$0x1]
        %v900 = vld [vmem:[%s893 + $0x18] sm:$0xf]
        %v901 = vld [vmem:[%s893 + $0x1c] sm:$0xf]
        %v902 = vld [vmem:[%s893 + $0x20] sm:$0x1]
        %v903 = vld [vmem:[%s893 + $0x24] sm:$0xf]
        %v904 = vld [vmem:[%s893 + $0x28] sm:$0xf]
        %v905 = vld [vmem:[%s893 + $0x2c] sm:$0x1]
        %v906 = vld [vmem:[%s893 + $0x30] sm:$0xf]
        %v907 = vld [vmem:[%s893 + $0x34] sm:$0xf]
        %v908 = vld [vmem:[%s893 + $0x38] sm:$0x1]
        %v909 = vld [vmem:[%s893 + $0x3c] sm:$0xf]
        %v910 = vld [vmem:[%s893 + $0x40] sm:$0xf]
        %v911 = vld [vmem:[%s893 + $0x44] sm:$0x1]
        %v912 = vld [vmem:[%s893 + $0x48] sm:$0xf]
        %v913 = vld [vmem:[%s893 + $0x4c] sm:$0xf]
        %v914 = vld [vmem:[%s893 + $0x50] sm:$0x1]
        %v915 = vld [vmem:[%s893 + $0x54] sm:$0xf]
        %v916 = vld [vmem:[%s893 + $0x58] sm:$0xf]
        %v917 = vld [vmem:[%s893 + $0x5c] sm:$0x1]
        %s918 = scalar_lea.vmem %s219, 6
        %v919 = vld [vmem:[%s918] sm:$0x3]
        %v936 = vunpack.c.l.b16 %v894
        %v937 = vunpack.c.l.b16 %v895
        %v938 = vunpack.c.l.b16 %v897
        %v939 = vunpack.c.l.b16 %v898
        %v940 = vunpack.c.l.b16 %v900
        %v941 = vunpack.c.l.b16 %v901
        %v942 = vunpack.c.l.b16 %v903
        %v943 = vunpack.c.l.b16 %v904
        %v944 = vunpack.c.l.b16 %v906
        %v945 = vunpack.c.l.b16 %v907
        %v946 = vunpack.c.l.b16 %v909
        %v947 = vunpack.c.l.b16 %v910
        %v948 = vunpack.c.l.b16 %v912
        %v949 = vunpack.c.l.b16 %v913
        %v950 = vunpack.c.l.b16 %v915
        %v951 = vunpack.c.l.b16 %v916
        %v952 = vpack.c.b16 %v937, %v936
        %v953 = vpack.c.b16 %v939, %v938
        %v954 = vpack.c.b16 %v941, %v940
        %v955 = vpack.c.b16 %v943, %v942
        %v956 = vpack.c.b16 %v945, %v944
        %v957 = vpack.c.b16 %v947, %v946
        %v958 = vpack.c.b16 %v949, %v948
        %v959 = vpack.c.b16 %v951, %v950
        %v961 = vsel %vm298, %v952, 0
        %v964 = vsel %vm298, %v953, 0
        %v967 = vsel %vm298, %v954, 0
        %v970 = vsel %vm298, %v955, 0
        %v973 = vsel %vm298, %v956, 0
        %v976 = vsel %vm298, %v957, 0
        %v979 = vsel %vm298, %v958, 0
        %v982 = vsel %vm298, %v959, 0
        %v985 = vsel %vm323, %v919, 0
        %987 = vmatpush.bf16.msra.mxu0 0
        %988 = vmatpush.bf16.msra.mxu0 0
        %989 = vmatpush.bf16.msra.mxu0 0
        %990 = vmatpush.bf16.msra.mxu0 0
        %991 = vmatpush.bf16.msra.mxu0 0
        %992 = vmatpush.bf16.msra.mxu0 0
        %993 = vmatpush.bf16.msra.mxu0 0
        %994 = vmatpush.bf16.msra.mxu0 %v985
        %995 = vmatmul.bf16.gmra.mxu0 %v961
        %v996 = vpop.f32.mrf.mxu0
        %v997 = vadd.f32 0.0, %v996
        %v998 = vpop.f32.mrf.mxu0
        %v999 = vadd.f32 0.0, %v998
        %1000 = vmatmul.bf16.gmra.mxu0 %v964
        %v1001 = vpop.f32.mrf.mxu0
        %v1002 = vadd.f32 0.0, %v1001
        %v1003 = vpop.f32.mrf.mxu0
        %v1004 = vadd.f32 0.0, %v1003
        %1005 = vmatmul.bf16.gmra.mxu0 %v967
        %v1006 = vpop.f32.mrf.mxu0
        %v1007 = vadd.f32 0.0, %v1006
        %v1008 = vpop.f32.mrf.mxu0
        %v1009 = vadd.f32 0.0, %v1008
        %1010 = vmatmul.bf16.gmra.mxu0 %v970
        %v1011 = vpop.f32.mrf.mxu0
        %v1012 = vadd.f32 0.0, %v1011
        %v1013 = vpop.f32.mrf.mxu0
        %v1014 = vadd.f32 0.0, %v1013
        %1015 = vmatmul.bf16.gmra.mxu0 %v973
        %v1016 = vpop.f32.mrf.mxu0
        %v1017 = vadd.f32 0.0, %v1016
        %v1018 = vpop.f32.mrf.mxu0
        %v1019 = vadd.f32 0.0, %v1018
        %1020 = vmatmul.bf16.gmra.mxu0 %v976
        %v1021 = vpop.f32.mrf.mxu0
        %v1022 = vadd.f32 0.0, %v1021
        %v1023 = vpop.f32.mrf.mxu0
        %v1024 = vadd.f32 0.0, %v1023
        %1025 = vmatmul.bf16.gmra.mxu0 %v979
        %v1026 = vpop.f32.mrf.mxu0
        %v1027 = vadd.f32 0.0, %v1026
        %v1028 = vpop.f32.mrf.mxu0
        %v1029 = vadd.f32 0.0, %v1028
        %1030 = vmatmul.bf16.gmra.mxu0 %v982
        %v1031 = vpop.f32.mrf.mxu0
        %v1032 = vadd.f32 0.0, %v1031
        %v1033 = vpop.f32.mrf.mxu0
        %v1034 = vadd.f32 0.0, %v1033
        %1035 = vdwg.mxu0
        %v1036 = vadd.f32 %v874, %v997
        %v1037 = vadd.f32 %v875, %v999
        %v1038 = vadd.f32 %v876, %v1002
        %v1039 = vadd.f32 %v877, %v1004
        %v1040 = vadd.f32 %v878, %v1007
        %v1041 = vadd.f32 %v879, %v1009
        %v1042 = vadd.f32 %v880, %v1012
        %v1043 = vadd.f32 %v881, %v1014
        %v1044 = vadd.f32 %v882, %v1017
        %v1045 = vadd.f32 %v883, %v1019
        %v1046 = vadd.f32 %v884, %v1022
        %v1047 = vadd.f32 %v885, %v1024
        %v1048 = vadd.f32 %v886, %v1027
        %v1049 = vadd.f32 %v887, %v1029
        %v1050 = vadd.f32 %v888, %v1032
        %v1051 = vadd.f32 %v889, %v1034
        %v1053 = vshrl.u32 %v894, 16
        %v1055 = vrot.slane %v1053, 4
        %v1056 = vshll.u32 %v894, 16
        %v1058 = vrot.slane %v1056, 5
        %v1059 = vor.u32 %v1055, %v1058
        %v1060 = vrot.slane %v1059, 4
        %v1062 = vshll.u32 %v895, 16
        %v1064 = vrot.slane %v1062, 5
        %v1065 = vsel %vm394, %v1060, %v1064
        %v1066 = vshrl.u32 %v895, 16
        %v1068 = vrot.slane %v1066, 4
        %v1069 = vor.u32 %v1068, %v1064
        %v1070 = vrot.slane %v1069, 4
        %v1072 = vshll.u32 %v896, 16
        %v1074 = vrot.slane %v1072, 5
        %v1075 = vsel %vm394, %v1070, %v1074
        %v1077 = vshrl.u32 %v897, 16
        %v1079 = vrot.slane %v1077, 4
        %v1080 = vshll.u32 %v897, 16
        %v1082 = vrot.slane %v1080, 5
        %v1083 = vor.u32 %v1079, %v1082
        %v1084 = vrot.slane %v1083, 4
        %v1086 = vshll.u32 %v898, 16
        %v1088 = vrot.slane %v1086, 5
        %v1089 = vsel %vm394, %v1084, %v1088
        %v1090 = vshrl.u32 %v898, 16
        %v1092 = vrot.slane %v1090, 4
        %v1093 = vor.u32 %v1092, %v1088
        %v1094 = vrot.slane %v1093, 4
        %v1096 = vshll.u32 %v899, 16
        %v1098 = vrot.slane %v1096, 5
        %v1099 = vsel %vm394, %v1094, %v1098
        %v1101 = vshrl.u32 %v900, 16
        %v1103 = vrot.slane %v1101, 4
        %v1104 = vshll.u32 %v900, 16
        %v1106 = vrot.slane %v1104, 5
        %v1107 = vor.u32 %v1103, %v1106
        %v1108 = vrot.slane %v1107, 4
        %v1110 = vshll.u32 %v901, 16
        %v1112 = vrot.slane %v1110, 5
        %v1113 = vsel %vm394, %v1108, %v1112
        %v1114 = vshrl.u32 %v901, 16
        %v1116 = vrot.slane %v1114, 4
        %v1117 = vor.u32 %v1116, %v1112
        %v1118 = vrot.slane %v1117, 4
        %v1120 = vshll.u32 %v902, 16
        %v1122 = vrot.slane %v1120, 5
        %v1123 = vsel %vm394, %v1118, %v1122
        %v1125 = vshrl.u32 %v903, 16
        %v1127 = vrot.slane %v1125, 4
        %v1128 = vshll.u32 %v903, 16
        %v1130 = vrot.slane %v1128, 5
        %v1131 = vor.u32 %v1127, %v1130
        %v1132 = vrot.slane %v1131, 4
        %v1134 = vshll.u32 %v904, 16
        %v1136 = vrot.slane %v1134, 5
        %v1137 = vsel %vm394, %v1132, %v1136
        %v1138 = vshrl.u32 %v904, 16
        %v1140 = vrot.slane %v1138, 4
        %v1141 = vor.u32 %v1140, %v1136
        %v1142 = vrot.slane %v1141, 4
        %v1144 = vshll.u32 %v905, 16
        %v1146 = vrot.slane %v1144, 5
        %v1147 = vsel %vm394, %v1142, %v1146
        %v1149 = vshrl.u32 %v906, 16
        %v1151 = vrot.slane %v1149, 4
        %v1152 = vshll.u32 %v906, 16
        %v1154 = vrot.slane %v1152, 5
        %v1155 = vor.u32 %v1151, %v1154
        %v1156 = vrot.slane %v1155, 4
        %v1158 = vshll.u32 %v907, 16
        %v1160 = vrot.slane %v1158, 5
        %v1161 = vsel %vm394, %v1156, %v1160
        %v1162 = vshrl.u32 %v907, 16
        %v1164 = vrot.slane %v1162, 4
        %v1165 = vor.u32 %v1164, %v1160
        %v1166 = vrot.slane %v1165, 4
        %v1168 = vshll.u32 %v908, 16
        %v1170 = vrot.slane %v1168, 5
        %v1171 = vsel %vm394, %v1166, %v1170
        %v1173 = vshrl.u32 %v909, 16
        %v1175 = vrot.slane %v1173, 4
        %v1176 = vshll.u32 %v909, 16
        %v1178 = vrot.slane %v1176, 5
        %v1179 = vor.u32 %v1175, %v1178
        %v1180 = vrot.slane %v1179, 4
        %v1182 = vshll.u32 %v910, 16
        %v1184 = vrot.slane %v1182, 5
        %v1185 = vsel %vm394, %v1180, %v1184
        %v1186 = vshrl.u32 %v910, 16
        %v1188 = vrot.slane %v1186, 4
        %v1189 = vor.u32 %v1188, %v1184
        %v1190 = vrot.slane %v1189, 4
        %v1192 = vshll.u32 %v911, 16
        %v1194 = vrot.slane %v1192, 5
        %v1195 = vsel %vm394, %v1190, %v1194
        %v1197 = vshrl.u32 %v912, 16
        %v1199 = vrot.slane %v1197, 4
        %v1200 = vshll.u32 %v912, 16
        %v1202 = vrot.slane %v1200, 5
        %v1203 = vor.u32 %v1199, %v1202
        %v1204 = vrot.slane %v1203, 4
        %v1206 = vshll.u32 %v913, 16
        %v1208 = vrot.slane %v1206, 5
        %v1209 = vsel %vm394, %v1204, %v1208
        %v1210 = vshrl.u32 %v913, 16
        %v1212 = vrot.slane %v1210, 4
        %v1213 = vor.u32 %v1212, %v1208
        %v1214 = vrot.slane %v1213, 4
        %v1216 = vshll.u32 %v914, 16
        %v1218 = vrot.slane %v1216, 5
        %v1219 = vsel %vm394, %v1214, %v1218
        %v1221 = vshrl.u32 %v915, 16
        %v1223 = vrot.slane %v1221, 4
        %v1224 = vshll.u32 %v915, 16
        %v1226 = vrot.slane %v1224, 5
        %v1227 = vor.u32 %v1223, %v1226
        %v1228 = vrot.slane %v1227, 4
        %v1230 = vshll.u32 %v916, 16
        %v1232 = vrot.slane %v1230, 5
        %v1233 = vsel %vm394, %v1228, %v1232
        %v1234 = vshrl.u32 %v916, 16
        %v1236 = vrot.slane %v1234, 4
        %v1237 = vor.u32 %v1236, %v1232
        %v1238 = vrot.slane %v1237, 4
        %v1240 = vshll.u32 %v917, 16
        %v1242 = vrot.slane %v1240, 5
        %v1243 = vsel %vm394, %v1238, %v1242
        %s1244 = scalar_lea.vmem %s219, 8
        %v1245 = vld [vmem:[%s1244] sm:$0x3]
        %v1246 = vunpack.c.l.b16 %v1065
        %v1247 = vunpack.c.l.b16 %v1075
        %v1248 = vunpack.c.l.b16 %v1089
        %v1249 = vunpack.c.l.b16 %v1099
        %v1250 = vunpack.c.l.b16 %v1113
        %v1251 = vunpack.c.l.b16 %v1123
        %v1252 = vunpack.c.l.b16 %v1137
        %v1253 = vunpack.c.l.b16 %v1147
        %v1254 = vunpack.c.l.b16 %v1161
        %v1255 = vunpack.c.l.b16 %v1171
        %v1256 = vunpack.c.l.b16 %v1185
        %v1257 = vunpack.c.l.b16 %v1195
        %v1258 = vunpack.c.l.b16 %v1209
        %v1259 = vunpack.c.l.b16 %v1219
        %v1260 = vunpack.c.l.b16 %v1233
        %v1261 = vunpack.c.l.b16 %v1243
        %v1262 = vpack.c.b16 %v1247, %v1246
        %v1263 = vpack.c.b16 %v1249, %v1248
        %v1264 = vpack.c.b16 %v1251, %v1250
        %v1265 = vpack.c.b16 %v1253, %v1252
        %v1266 = vpack.c.b16 %v1255, %v1254
        %v1267 = vpack.c.b16 %v1257, %v1256
        %v1268 = vpack.c.b16 %v1259, %v1258
        %v1269 = vpack.c.b16 %v1261, %v1260
        %v1271 = vsel %vm298, %v1262, 0
        %v1274 = vsel %vm298, %v1263, 0
        %v1277 = vsel %vm298, %v1264, 0
        %v1280 = vsel %vm298, %v1265, 0
        %v1283 = vsel %vm298, %v1266, 0
        %v1286 = vsel %vm298, %v1267, 0
        %v1289 = vsel %vm298, %v1268, 0
        %v1292 = vsel %vm298, %v1269, 0
        %v1295 = vsel %vm323, %v1245, 0
        %1297 = vmatpush.bf16.msra.mxu0 0
        %1298 = vmatpush.bf16.msra.mxu0 0
        %1299 = vmatpush.bf16.msra.mxu0 0
        %1300 = vmatpush.bf16.msra.mxu0 0
        %1301 = vmatpush.bf16.msra.mxu0 0
        %1302 = vmatpush.bf16.msra.mxu0 0
        %1303 = vmatpush.bf16.msra.mxu0 0
        %1304 = vmatpush.bf16.msra.mxu0 %v1295
        %1305 = vmatmul.bf16.gmra.mxu0 %v1271
        %v1306 = vpop.f32.mrf.mxu0
        %v1307 = vadd.f32 0.0, %v1306
        %v1308 = vpop.f32.mrf.mxu0
        %v1309 = vadd.f32 0.0, %v1308
        %1310 = vmatmul.bf16.gmra.mxu0 %v1274
        %v1311 = vpop.f32.mrf.mxu0
        %v1312 = vadd.f32 0.0, %v1311
        %v1313 = vpop.f32.mrf.mxu0
        %v1314 = vadd.f32 0.0, %v1313
        %1315 = vmatmul.bf16.gmra.mxu0 %v1277
        %v1316 = vpop.f32.mrf.mxu0
        %v1317 = vadd.f32 0.0, %v1316
        %v1318 = vpop.f32.mrf.mxu0
        %v1319 = vadd.f32 0.0, %v1318
        %1320 = vmatmul.bf16.gmra.mxu0 %v1280
        %v1321 = vpop.f32.mrf.mxu0
        %v1322 = vadd.f32 0.0, %v1321
        %v1323 = vpop.f32.mrf.mxu0
        %v1324 = vadd.f32 0.0, %v1323
        %1325 = vmatmul.bf16.gmra.mxu0 %v1283
        %v1326 = vpop.f32.mrf.mxu0
        %v1327 = vadd.f32 0.0, %v1326
        %v1328 = vpop.f32.mrf.mxu0
        %v1329 = vadd.f32 0.0, %v1328
        %1330 = vmatmul.bf16.gmra.mxu0 %v1286
        %v1331 = vpop.f32.mrf.mxu0
        %v1332 = vadd.f32 0.0, %v1331
        %v1333 = vpop.f32.mrf.mxu0
        %v1334 = vadd.f32 0.0, %v1333
        %1335 = vmatmul.bf16.gmra.mxu0 %v1289
        %v1336 = vpop.f32.mrf.mxu0
        %v1337 = vadd.f32 0.0, %v1336
        %v1338 = vpop.f32.mrf.mxu0
        %v1339 = vadd.f32 0.0, %v1338
        %1340 = vmatmul.bf16.gmra.mxu0 %v1292
        %v1341 = vpop.f32.mrf.mxu0
        %v1342 = vadd.f32 0.0, %v1341
        %v1343 = vpop.f32.mrf.mxu0
        %v1344 = vadd.f32 0.0, %v1343
        %1345 = vdwg.mxu0
        %v1346 = vadd.f32 %v1036, %v1307
        %v1347 = vadd.f32 %v1037, %v1309
        %v1348 = vadd.f32 %v1038, %v1312
        %v1349 = vadd.f32 %v1039, %v1314
        %v1350 = vadd.f32 %v1040, %v1317
        %v1351 = vadd.f32 %v1041, %v1319
        %v1352 = vadd.f32 %v1042, %v1322
        %v1353 = vadd.f32 %v1043, %v1324
        %v1354 = vadd.f32 %v1044, %v1327
        %v1355 = vadd.f32 %v1045, %v1329
        %v1356 = vadd.f32 %v1046, %v1332
        %v1357 = vadd.f32 %v1047, %v1334
        %v1358 = vadd.f32 %v1048, %v1337
        %v1359 = vadd.f32 %v1049, %v1339
        %v1360 = vadd.f32 %v1050, %v1342
        %v1361 = vadd.f32 %v1051, %v1344
        %v1370 = vrot.slane %v894, 5
        %v1371 = vrot.slane %v1370, 4
        %v1372 = vrot.slane %v895, 5
        %v1373 = vsel %vm715, %v1371, %v1372
        %v1374 = vrot.slane %v1372, 4
        %v1375 = vrot.slane %v896, 5
        %v1376 = vsel %vm715, %v1374, %v1375
        %v1377 = vrot.slane %v897, 5
        %v1378 = vrot.slane %v1377, 4
        %v1379 = vrot.slane %v898, 5
        %v1380 = vsel %vm715, %v1378, %v1379
        %v1381 = vrot.slane %v1379, 4
        %v1382 = vrot.slane %v899, 5
        %v1383 = vsel %vm715, %v1381, %v1382
        %v1384 = vrot.slane %v900, 5
        %v1385 = vrot.slane %v1384, 4
        %v1386 = vrot.slane %v901, 5
        %v1387 = vsel %vm715, %v1385, %v1386
        %v1388 = vrot.slane %v1386, 4
        %v1389 = vrot.slane %v902, 5
        %v1390 = vsel %vm715, %v1388, %v1389
        %v1391 = vrot.slane %v903, 5
        %v1392 = vrot.slane %v1391, 4
        %v1393 = vrot.slane %v904, 5
        %v1394 = vsel %vm715, %v1392, %v1393
        %v1395 = vrot.slane %v1393, 4
        %v1396 = vrot.slane %v905, 5
        %v1397 = vsel %vm715, %v1395, %v1396
        %v1398 = vrot.slane %v906, 5
        %v1399 = vrot.slane %v1398, 4
        %v1400 = vrot.slane %v907, 5
        %v1401 = vsel %vm715, %v1399, %v1400
        %v1402 = vrot.slane %v1400, 4
        %v1403 = vrot.slane %v908, 5
        %v1404 = vsel %vm715, %v1402, %v1403
        %v1405 = vrot.slane %v909, 5
        %v1406 = vrot.slane %v1405, 4
        %v1407 = vrot.slane %v910, 5
        %v1408 = vsel %vm715, %v1406, %v1407
        %v1409 = vrot.slane %v1407, 4
        %v1410 = vrot.slane %v911, 5
        %v1411 = vsel %vm715, %v1409, %v1410
        %v1412 = vrot.slane %v912, 5
        %v1413 = vrot.slane %v1412, 4
        %v1414 = vrot.slane %v913, 5
        %v1415 = vsel %vm715, %v1413, %v1414
        %v1416 = vrot.slane %v1414, 4
        %v1417 = vrot.slane %v914, 5
        %v1418 = vsel %vm715, %v1416, %v1417
        %v1419 = vrot.slane %v915, 5
        %v1420 = vrot.slane %v1419, 4
        %v1421 = vrot.slane %v916, 5
        %v1422 = vsel %vm715, %v1420, %v1421
        %v1423 = vrot.slane %v1421, 4
        %v1424 = vrot.slane %v917, 5
        %v1425 = vsel %vm715, %v1423, %v1424
        %s1426 = scalar_lea.vmem %s219, 10
        %v1427 = vld [vmem:[%s1426] sm:$0x3]
        %v1428 = vunpack.c.l.b16 %v1373
        %v1429 = vunpack.c.l.b16 %v1376
        %v1430 = vunpack.c.l.b16 %v1380
        %v1431 = vunpack.c.l.b16 %v1383
        %v1432 = vunpack.c.l.b16 %v1387
        %v1433 = vunpack.c.l.b16 %v1390
        %v1434 = vunpack.c.l.b16 %v1394
        %v1435 = vunpack.c.l.b16 %v1397
        %v1436 = vunpack.c.l.b16 %v1401
        %v1437 = vunpack.c.l.b16 %v1404
        %v1438 = vunpack.c.l.b16 %v1408
        %v1439 = vunpack.c.l.b16 %v1411
        %v1440 = vunpack.c.l.b16 %v1415
        %v1441 = vunpack.c.l.b16 %v1418
        %v1442 = vunpack.c.l.b16 %v1422
        %v1443 = vunpack.c.l.b16 %v1425
        %v1444 = vpack.c.b16 %v1429, %v1428
        %v1445 = vpack.c.b16 %v1431, %v1430
        %v1446 = vpack.c.b16 %v1433, %v1432
        %v1447 = vpack.c.b16 %v1435, %v1434
        %v1448 = vpack.c.b16 %v1437, %v1436
        %v1449 = vpack.c.b16 %v1439, %v1438
        %v1450 = vpack.c.b16 %v1441, %v1440
        %v1451 = vpack.c.b16 %v1443, %v1442
        %v1453 = vsel %vm298, %v1444, 0
        %v1456 = vsel %vm298, %v1445, 0
        %v1459 = vsel %vm298, %v1446, 0
        %v1462 = vsel %vm298, %v1447, 0
        %v1465 = vsel %vm298, %v1448, 0
        %v1468 = vsel %vm298, %v1449, 0
        %v1471 = vsel %vm298, %v1450, 0
        %v1474 = vsel %vm298, %v1451, 0
        %v1477 = vsel %vm323, %v1427, 0
        %1479 = vmatpush.bf16.msra.mxu0 0
        %1480 = vmatpush.bf16.msra.mxu0 0
        %1481 = vmatpush.bf16.msra.mxu0 0
        %1482 = vmatpush.bf16.msra.mxu0 0
        %1483 = vmatpush.bf16.msra.mxu0 0
        %1484 = vmatpush.bf16.msra.mxu0 0
        %1485 = vmatpush.bf16.msra.mxu0 0
        %1486 = vmatpush.bf16.msra.mxu0 %v1477
        %1487 = vmatmul.bf16.gmra.mxu0 %v1453
        %v1488 = vpop.f32.mrf.mxu0
        %v1489 = vadd.f32 0.0, %v1488
        %v1490 = vpop.f32.mrf.mxu0
        %v1491 = vadd.f32 0.0, %v1490
        %1492 = vmatmul.bf16.gmra.mxu0 %v1456
        %v1493 = vpop.f32.mrf.mxu0
        %v1494 = vadd.f32 0.0, %v1493
        %v1495 = vpop.f32.mrf.mxu0
        %v1496 = vadd.f32 0.0, %v1495
        %1497 = vmatmul.bf16.gmra.mxu0 %v1459
        %v1498 = vpop.f32.mrf.mxu0
        %v1499 = vadd.f32 0.0, %v1498
        %v1500 = vpop.f32.mrf.mxu0
        %v1501 = vadd.f32 0.0, %v1500
        %1502 = vmatmul.bf16.gmra.mxu0 %v1462
        %v1503 = vpop.f32.mrf.mxu0
        %v1504 = vadd.f32 0.0, %v1503
        %v1505 = vpop.f32.mrf.mxu0
        %v1506 = vadd.f32 0.0, %v1505
        %1507 = vmatmul.bf16.gmra.mxu0 %v1465
        %v1508 = vpop.f32.mrf.mxu0
        %v1509 = vadd.f32 0.0, %v1508
        %v1510 = vpop.f32.mrf.mxu0
        %v1511 = vadd.f32 0.0, %v1510
        %1512 = vmatmul.bf16.gmra.mxu0 %v1468
        %v1513 = vpop.f32.mrf.mxu0
        %v1514 = vadd.f32 0.0, %v1513
        %v1515 = vpop.f32.mrf.mxu0
        %v1516 = vadd.f32 0.0, %v1515
        %1517 = vmatmul.bf16.gmra.mxu0 %v1471
        %v1518 = vpop.f32.mrf.mxu0
        %v1519 = vadd.f32 0.0, %v1518
        %v1520 = vpop.f32.mrf.mxu0
        %v1521 = vadd.f32 0.0, %v1520
        %1522 = vmatmul.bf16.gmra.mxu0 %v1474
        %v1523 = vpop.f32.mrf.mxu0
        %v1524 = vadd.f32 0.0, %v1523
        %v1525 = vpop.f32.mrf.mxu0
        %v1526 = vadd.f32 0.0, %v1525
        %1527 = vdwg.mxu0
        %v1528 = vadd.f32 %v1346, %v1489
        %v1529 = vadd.f32 %v1347, %v1491
        %v1530 = vadd.f32 %v1348, %v1494
        %v1531 = vadd.f32 %v1349, %v1496
        %v1532 = vadd.f32 %v1350, %v1499
        %v1533 = vadd.f32 %v1351, %v1501
        %v1534 = vadd.f32 %v1352, %v1504
        %v1535 = vadd.f32 %v1353, %v1506
        %v1536 = vadd.f32 %v1354, %v1509
        %v1537 = vadd.f32 %v1355, %v1511
        %v1538 = vadd.f32 %v1356, %v1514
        %v1539 = vadd.f32 %v1357, %v1516
        %v1540 = vadd.f32 %v1358, %v1519
        %v1541 = vadd.f32 %v1359, %v1521
        %v1542 = vadd.f32 %v1360, %v1524
        %v1543 = vadd.f32 %v1361, %v1526
        %s1544 = sadd.s32 %s225, 2
        %s1545 = smul.u32 %s1544, 3
        %s1546 = smul.addr %s1545, 4
        %s1547 = scalar_lea.vmem %s215, %s1546
        %v1548 = vld [vmem:[%s1547] sm:$0xf]
        %v1549 = vld [vmem:[%s1547 + $0x4] sm:$0xf]
        %v1550 = vld [vmem:[%s1547 + $0x8] sm:$0x1]
        %v1551 = vld [vmem:[%s1547 + $0xc] sm:$0xf]
        %v1552 = vld [vmem:[%s1547 + $0x10] sm:$0xf]
        %v1553 = vld [vmem:[%s1547 + $0x14] sm:$0x1]
        %v1554 = vld [vmem:[%s1547 + $0x18] sm:$0xf]
        %v1555 = vld [vmem:[%s1547 + $0x1c] sm:$0xf]
        %v1556 = vld [vmem:[%s1547 + $0x20] sm:$0x1]
        %v1557 = vld [vmem:[%s1547 + $0x24] sm:$0xf]
        %v1558 = vld [vmem:[%s1547 + $0x28] sm:$0xf]
        %v1559 = vld [vmem:[%s1547 + $0x2c] sm:$0x1]
        %v1560 = vld [vmem:[%s1547 + $0x30] sm:$0xf]
        %v1561 = vld [vmem:[%s1547 + $0x34] sm:$0xf]
        %v1562 = vld [vmem:[%s1547 + $0x38] sm:$0x1]
        %v1563 = vld [vmem:[%s1547 + $0x3c] sm:$0xf]
        %v1564 = vld [vmem:[%s1547 + $0x40] sm:$0xf]
        %v1565 = vld [vmem:[%s1547 + $0x44] sm:$0x1]
        %v1566 = vld [vmem:[%s1547 + $0x48] sm:$0xf]
        %v1567 = vld [vmem:[%s1547 + $0x4c] sm:$0xf]
        %v1568 = vld [vmem:[%s1547 + $0x50] sm:$0x1]
        %v1569 = vld [vmem:[%s1547 + $0x54] sm:$0xf]
        %v1570 = vld [vmem:[%s1547 + $0x58] sm:$0xf]
        %v1571 = vld [vmem:[%s1547 + $0x5c] sm:$0x1]
        %s1572 = scalar_lea.vmem %s219, 12
        %v1573 = vld [vmem:[%s1572] sm:$0x3]
        %v1590 = vunpack.c.l.b16 %v1548
        %v1591 = vunpack.c.l.b16 %v1549
        %v1592 = vunpack.c.l.b16 %v1551
        %v1593 = vunpack.c.l.b16 %v1552
        %v1594 = vunpack.c.l.b16 %v1554
        %v1595 = vunpack.c.l.b16 %v1555
        %v1596 = vunpack.c.l.b16 %v1557
        %v1597 = vunpack.c.l.b16 %v1558
        %v1598 = vunpack.c.l.b16 %v1560
        %v1599 = vunpack.c.l.b16 %v1561
        %v1600 = vunpack.c.l.b16 %v1563
        %v1601 = vunpack.c.l.b16 %v1564
        %v1602 = vunpack.c.l.b16 %v1566
        %v1603 = vunpack.c.l.b16 %v1567
        %v1604 = vunpack.c.l.b16 %v1569
        %v1605 = vunpack.c.l.b16 %v1570
        %v1606 = vpack.c.b16 %v1591, %v1590
        %v1607 = vpack.c.b16 %v1593, %v1592
        %v1608 = vpack.c.b16 %v1595, %v1594
        %v1609 = vpack.c.b16 %v1597, %v1596
        %v1610 = vpack.c.b16 %v1599, %v1598
        %v1611 = vpack.c.b16 %v1601, %v1600
        %v1612 = vpack.c.b16 %v1603, %v1602
        %v1613 = vpack.c.b16 %v1605, %v1604
        %v1615 = vsel %vm298, %v1606, 0
        %v1618 = vsel %vm298, %v1607, 0
        %v1621 = vsel %vm298, %v1608, 0
        %v1624 = vsel %vm298, %v1609, 0
        %v1627 = vsel %vm298, %v1610, 0
        %v1630 = vsel %vm298, %v1611, 0
        %v1633 = vsel %vm298, %v1612, 0
        %v1636 = vsel %vm298, %v1613, 0
        %v1639 = vsel %vm323, %v1573, 0
        %1641 = vmatpush.bf16.msra.mxu0 0
        %1642 = vmatpush.bf16.msra.mxu0 0
        %1643 = vmatpush.bf16.msra.mxu0 0
        %1644 = vmatpush.bf16.msra.mxu0 0
        %1645 = vmatpush.bf16.msra.mxu0 0
        %1646 = vmatpush.bf16.msra.mxu0 0
        %1647 = vmatpush.bf16.msra.mxu0 0
        %1648 = vmatpush.bf16.msra.mxu0 %v1639
        %1649 = vmatmul.bf16.gmra.mxu0 %v1615
        %v1650 = vpop.f32.mrf.mxu0
        %v1651 = vadd.f32 0.0, %v1650
        %v1652 = vpop.f32.mrf.mxu0
        %v1653 = vadd.f32 0.0, %v1652
        %1654 = vmatmul.bf16.gmra.mxu0 %v1618
        %v1655 = vpop.f32.mrf.mxu0
        %v1656 = vadd.f32 0.0, %v1655
        %v1657 = vpop.f32.mrf.mxu0
        %v1658 = vadd.f32 0.0, %v1657
        %1659 = vmatmul.bf16.gmra.mxu0 %v1621
        %v1660 = vpop.f32.mrf.mxu0
        %v1661 = vadd.f32 0.0, %v1660
        %v1662 = vpop.f32.mrf.mxu0
        %v1663 = vadd.f32 0.0, %v1662
        %1664 = vmatmul.bf16.gmra.mxu0 %v1624
        %v1665 = vpop.f32.mrf.mxu0
        %v1666 = vadd.f32 0.0, %v1665
        %v1667 = vpop.f32.mrf.mxu0
        %v1668 = vadd.f32 0.0, %v1667
        %1669 = vmatmul.bf16.gmra.mxu0 %v1627
        %v1670 = vpop.f32.mrf.mxu0
        %v1671 = vadd.f32 0.0, %v1670
        %v1672 = vpop.f32.mrf.mxu0
        %v1673 = vadd.f32 0.0, %v1672
        %1674 = vmatmul.bf16.gmra.mxu0 %v1630
        %v1675 = vpop.f32.mrf.mxu0
        %v1676 = vadd.f32 0.0, %v1675
        %v1677 = vpop.f32.mrf.mxu0
        %v1678 = vadd.f32 0.0, %v1677
        %1679 = vmatmul.bf16.gmra.mxu0 %v1633
        %v1680 = vpop.f32.mrf.mxu0
        %v1681 = vadd.f32 0.0, %v1680
        %v1682 = vpop.f32.mrf.mxu0
        %v1683 = vadd.f32 0.0, %v1682
        %1684 = vmatmul.bf16.gmra.mxu0 %v1636
        %v1685 = vpop.f32.mrf.mxu0
        %v1686 = vadd.f32 0.0, %v1685
        %v1687 = vpop.f32.mrf.mxu0
        %v1688 = vadd.f32 0.0, %v1687
        %1689 = vdwg.mxu0
        %v1690 = vadd.f32 %v1528, %v1651
        %v1691 = vadd.f32 %v1529, %v1653
        %v1692 = vadd.f32 %v1530, %v1656
        %v1693 = vadd.f32 %v1531, %v1658
        %v1694 = vadd.f32 %v1532, %v1661
        %v1695 = vadd.f32 %v1533, %v1663
        %v1696 = vadd.f32 %v1534, %v1666
        %v1697 = vadd.f32 %v1535, %v1668
        %v1698 = vadd.f32 %v1536, %v1671
        %v1699 = vadd.f32 %v1537, %v1673
        %v1700 = vadd.f32 %v1538, %v1676
        %v1701 = vadd.f32 %v1539, %v1678
        %v1702 = vadd.f32 %v1540, %v1681
        %v1703 = vadd.f32 %v1541, %v1683
        %v1704 = vadd.f32 %v1542, %v1686
        %v1705 = vadd.f32 %v1543, %v1688
        %v1707 = vshrl.u32 %v1548, 16
        %v1709 = vrot.slane %v1707, 4
        %v1710 = vshll.u32 %v1548, 16
        %v1712 = vrot.slane %v1710, 5
        %v1713 = vor.u32 %v1709, %v1712
        %v1714 = vrot.slane %v1713, 4
        %v1716 = vshll.u32 %v1549, 16
        %v1718 = vrot.slane %v1716, 5
        %v1719 = vsel %vm394, %v1714, %v1718
        %v1720 = vshrl.u32 %v1549, 16
        %v1722 = vrot.slane %v1720, 4
        %v1723 = vor.u32 %v1722, %v1718
        %v1724 = vrot.slane %v1723, 4
        %v1726 = vshll.u32 %v1550, 16
        %v1728 = vrot.slane %v1726, 5
        %v1729 = vsel %vm394, %v1724, %v1728
        %v1731 = vshrl.u32 %v1551, 16
        %v1733 = vrot.slane %v1731, 4
        %v1734 = vshll.u32 %v1551, 16
        %v1736 = vrot.slane %v1734, 5
        %v1737 = vor.u32 %v1733, %v1736
        %v1738 = vrot.slane %v1737, 4
        %v1740 = vshll.u32 %v1552, 16
        %v1742 = vrot.slane %v1740, 5
        %v1743 = vsel %vm394, %v1738, %v1742
        %v1744 = vshrl.u32 %v1552, 16
        %v1746 = vrot.slane %v1744, 4
        %v1747 = vor.u32 %v1746, %v1742
        %v1748 = vrot.slane %v1747, 4
        %v1750 = vshll.u32 %v1553, 16
        %v1752 = vrot.slane %v1750, 5
        %v1753 = vsel %vm394, %v1748, %v1752
        %v1755 = vshrl.u32 %v1554, 16
        %v1757 = vrot.slane %v1755, 4
        %v1758 = vshll.u32 %v1554, 16
        %v1760 = vrot.slane %v1758, 5
        %v1761 = vor.u32 %v1757, %v1760
        %v1762 = vrot.slane %v1761, 4
        %v1764 = vshll.u32 %v1555, 16
        %v1766 = vrot.slane %v1764, 5
        %v1767 = vsel %vm394, %v1762, %v1766
        %v1768 = vshrl.u32 %v1555, 16
        %v1770 = vrot.slane %v1768, 4
        %v1771 = vor.u32 %v1770, %v1766
        %v1772 = vrot.slane %v1771, 4
        %v1774 = vshll.u32 %v1556, 16
        %v1776 = vrot.slane %v1774, 5
        %v1777 = vsel %vm394, %v1772, %v1776
        %v1779 = vshrl.u32 %v1557, 16
        %v1781 = vrot.slane %v1779, 4
        %v1782 = vshll.u32 %v1557, 16
        %v1784 = vrot.slane %v1782, 5
        %v1785 = vor.u32 %v1781, %v1784
        %v1786 = vrot.slane %v1785, 4
        %v1788 = vshll.u32 %v1558, 16
        %v1790 = vrot.slane %v1788, 5
        %v1791 = vsel %vm394, %v1786, %v1790
        %v1792 = vshrl.u32 %v1558, 16
        %v1794 = vrot.slane %v1792, 4
        %v1795 = vor.u32 %v1794, %v1790
        %v1796 = vrot.slane %v1795, 4
        %v1798 = vshll.u32 %v1559, 16
        %v1800 = vrot.slane %v1798, 5
        %v1801 = vsel %vm394, %v1796, %v1800
        %v1803 = vshrl.u32 %v1560, 16
        %v1805 = vrot.slane %v1803, 4
        %v1806 = vshll.u32 %v1560, 16
        %v1808 = vrot.slane %v1806, 5
        %v1809 = vor.u32 %v1805, %v1808
        %v1810 = vrot.slane %v1809, 4
        %v1812 = vshll.u32 %v1561, 16
        %v1814 = vrot.slane %v1812, 5
        %v1815 = vsel %vm394, %v1810, %v1814
        %v1816 = vshrl.u32 %v1561, 16
        %v1818 = vrot.slane %v1816, 4
        %v1819 = vor.u32 %v1818, %v1814
        %v1820 = vrot.slane %v1819, 4
        %v1822 = vshll.u32 %v1562, 16
        %v1824 = vrot.slane %v1822, 5
        %v1825 = vsel %vm394, %v1820, %v1824
        %v1827 = vshrl.u32 %v1563, 16
        %v1829 = vrot.slane %v1827, 4
        %v1830 = vshll.u32 %v1563, 16
        %v1832 = vrot.slane %v1830, 5
        %v1833 = vor.u32 %v1829, %v1832
        %v1834 = vrot.slane %v1833, 4
        %v1836 = vshll.u32 %v1564, 16
        %v1838 = vrot.slane %v1836, 5
        %v1839 = vsel %vm394, %v1834, %v1838
        %v1840 = vshrl.u32 %v1564, 16
        %v1842 = vrot.slane %v1840, 4
        %v1843 = vor.u32 %v1842, %v1838
        %v1844 = vrot.slane %v1843, 4
        %v1846 = vshll.u32 %v1565, 16
        %v1848 = vrot.slane %v1846, 5
        %v1849 = vsel %vm394, %v1844, %v1848
        %v1851 = vshrl.u32 %v1566, 16
        %v1853 = vrot.slane %v1851, 4
        %v1854 = vshll.u32 %v1566, 16
        %v1856 = vrot.slane %v1854, 5
        %v1857 = vor.u32 %v1853, %v1856
        %v1858 = vrot.slane %v1857, 4
        %v1860 = vshll.u32 %v1567, 16
        %v1862 = vrot.slane %v1860, 5
        %v1863 = vsel %vm394, %v1858, %v1862
        %v1864 = vshrl.u32 %v1567, 16
        %v1866 = vrot.slane %v1864, 4
        %v1867 = vor.u32 %v1866, %v1862
        %v1868 = vrot.slane %v1867, 4
        %v1870 = vshll.u32 %v1568, 16
        %v1872 = vrot.slane %v1870, 5
        %v1873 = vsel %vm394, %v1868, %v1872
        %v1875 = vshrl.u32 %v1569, 16
        %v1877 = vrot.slane %v1875, 4
        %v1878 = vshll.u32 %v1569, 16
        %v1880 = vrot.slane %v1878, 5
        %v1881 = vor.u32 %v1877, %v1880
        %v1882 = vrot.slane %v1881, 4
        %v1884 = vshll.u32 %v1570, 16
        %v1886 = vrot.slane %v1884, 5
        %v1887 = vsel %vm394, %v1882, %v1886
        %v1888 = vshrl.u32 %v1570, 16
        %v1890 = vrot.slane %v1888, 4
        %v1891 = vor.u32 %v1890, %v1886
        %v1892 = vrot.slane %v1891, 4
        %v1894 = vshll.u32 %v1571, 16
        %v1896 = vrot.slane %v1894, 5
        %v1897 = vsel %vm394, %v1892, %v1896
        %s1898 = scalar_lea.vmem %s219, 14
        %v1899 = vld [vmem:[%s1898] sm:$0x3]
        %v1900 = vunpack.c.l.b16 %v1719
        %v1901 = vunpack.c.l.b16 %v1729
        %v1902 = vunpack.c.l.b16 %v1743
        %v1903 = vunpack.c.l.b16 %v1753
        %v1904 = vunpack.c.l.b16 %v1767
        %v1905 = vunpack.c.l.b16 %v1777
        %v1906 = vunpack.c.l.b16 %v1791
        %v1907 = vunpack.c.l.b16 %v1801
        %v1908 = vunpack.c.l.b16 %v1815
        %v1909 = vunpack.c.l.b16 %v1825
        %v1910 = vunpack.c.l.b16 %v1839
        %v1911 = vunpack.c.l.b16 %v1849
        %v1912 = vunpack.c.l.b16 %v1863
        %v1913 = vunpack.c.l.b16 %v1873
        %v1914 = vunpack.c.l.b16 %v1887
        %v1915 = vunpack.c.l.b16 %v1897
        %v1916 = vpack.c.b16 %v1901, %v1900
        %v1917 = vpack.c.b16 %v1903, %v1902
        %v1918 = vpack.c.b16 %v1905, %v1904
        %v1919 = vpack.c.b16 %v1907, %v1906
        %v1920 = vpack.c.b16 %v1909, %v1908
        %v1921 = vpack.c.b16 %v1911, %v1910
        %v1922 = vpack.c.b16 %v1913, %v1912
        %v1923 = vpack.c.b16 %v1915, %v1914
        %v1925 = vsel %vm298, %v1916, 0
        %v1928 = vsel %vm298, %v1917, 0
        %v1931 = vsel %vm298, %v1918, 0
        %v1934 = vsel %vm298, %v1919, 0
        %v1937 = vsel %vm298, %v1920, 0
        %v1940 = vsel %vm298, %v1921, 0
        %v1943 = vsel %vm298, %v1922, 0
        %v1946 = vsel %vm298, %v1923, 0
        %v1949 = vsel %vm323, %v1899, 0
        %1951 = vmatpush.bf16.msra.mxu0 0
        %1952 = vmatpush.bf16.msra.mxu0 0
        %1953 = vmatpush.bf16.msra.mxu0 0
        %1954 = vmatpush.bf16.msra.mxu0 0
        %1955 = vmatpush.bf16.msra.mxu0 0
        %1956 = vmatpush.bf16.msra.mxu0 0
        %1957 = vmatpush.bf16.msra.mxu0 0
        %1958 = vmatpush.bf16.msra.mxu0 %v1949
        %1959 = vmatmul.bf16.gmra.mxu0 %v1925
        %v1960 = vpop.f32.mrf.mxu0
        %v1961 = vadd.f32 0.0, %v1960
        %v1962 = vpop.f32.mrf.mxu0
        %v1963 = vadd.f32 0.0, %v1962
        %1964 = vmatmul.bf16.gmra.mxu0 %v1928
        %v1965 = vpop.f32.mrf.mxu0
        %v1966 = vadd.f32 0.0, %v1965
        %v1967 = vpop.f32.mrf.mxu0
        %v1968 = vadd.f32 0.0, %v1967
        %1969 = vmatmul.bf16.gmra.mxu0 %v1931
        %v1970 = vpop.f32.mrf.mxu0
        %v1971 = vadd.f32 0.0, %v1970
        %v1972 = vpop.f32.mrf.mxu0
        %v1973 = vadd.f32 0.0, %v1972
        %1974 = vmatmul.bf16.gmra.mxu0 %v1934
        %v1975 = vpop.f32.mrf.mxu0
        %v1976 = vadd.f32 0.0, %v1975
        %v1977 = vpop.f32.mrf.mxu0
        %v1978 = vadd.f32 0.0, %v1977
        %1979 = vmatmul.bf16.gmra.mxu0 %v1937
        %v1980 = vpop.f32.mrf.mxu0
        %v1981 = vadd.f32 0.0, %v1980
        %v1982 = vpop.f32.mrf.mxu0
        %v1983 = vadd.f32 0.0, %v1982
        %1984 = vmatmul.bf16.gmra.mxu0 %v1940
        %v1985 = vpop.f32.mrf.mxu0
        %v1986 = vadd.f32 0.0, %v1985
        %v1987 = vpop.f32.mrf.mxu0
        %v1988 = vadd.f32 0.0, %v1987
        %1989 = vmatmul.bf16.gmra.mxu0 %v1943
        %v1990 = vpop.f32.mrf.mxu0
        %v1991 = vadd.f32 0.0, %v1990
        %v1992 = vpop.f32.mrf.mxu0
        %v1993 = vadd.f32 0.0, %v1992
        %1994 = vmatmul.bf16.gmra.mxu0 %v1946
        %v1995 = vpop.f32.mrf.mxu0
        %v1996 = vadd.f32 0.0, %v1995
        %v1997 = vpop.f32.mrf.mxu0
        %v1998 = vadd.f32 0.0, %v1997
        %1999 = vdwg.mxu0
        %v2000 = vadd.f32 %v1690, %v1961
        %v2001 = vadd.f32 %v1691, %v1963
        %v2002 = vadd.f32 %v1692, %v1966
        %v2003 = vadd.f32 %v1693, %v1968
        %v2004 = vadd.f32 %v1694, %v1971
        %v2005 = vadd.f32 %v1695, %v1973
        %v2006 = vadd.f32 %v1696, %v1976
        %v2007 = vadd.f32 %v1697, %v1978
        %v2008 = vadd.f32 %v1698, %v1981
        %v2009 = vadd.f32 %v1699, %v1983
        %v2010 = vadd.f32 %v1700, %v1986
        %v2011 = vadd.f32 %v1701, %v1988
        %v2012 = vadd.f32 %v1702, %v1991
        %v2013 = vadd.f32 %v1703, %v1993
        %v2014 = vadd.f32 %v1704, %v1996
        %v2015 = vadd.f32 %v1705, %v1998
        %v2024 = vrot.slane %v1548, 5
        %v2025 = vrot.slane %v2024, 4
        %v2026 = vrot.slane %v1549, 5
        %v2027 = vsel %vm715, %v2025, %v2026
        %v2028 = vrot.slane %v2026, 4
        %v2029 = vrot.slane %v1550, 5
        %v2030 = vsel %vm715, %v2028, %v2029
        %v2031 = vrot.slane %v1551, 5
        %v2032 = vrot.slane %v2031, 4
        %v2033 = vrot.slane %v1552, 5
        %v2034 = vsel %vm715, %v2032, %v2033
        %v2035 = vrot.slane %v2033, 4
        %v2036 = vrot.slane %v1553, 5
        %v2037 = vsel %vm715, %v2035, %v2036
        %v2038 = vrot.slane %v1554, 5
        %v2039 = vrot.slane %v2038, 4
        %v2040 = vrot.slane %v1555, 5
        %v2041 = vsel %vm715, %v2039, %v2040
        %v2042 = vrot.slane %v2040, 4
        %v2043 = vrot.slane %v1556, 5
        %v2044 = vsel %vm715, %v2042, %v2043
        %v2045 = vrot.slane %v1557, 5
        %v2046 = vrot.slane %v2045, 4
        %v2047 = vrot.slane %v1558, 5
        %v2048 = vsel %vm715, %v2046, %v2047
        %v2049 = vrot.slane %v2047, 4
        %v2050 = vrot.slane %v1559, 5
        %v2051 = vsel %vm715, %v2049, %v2050
        %v2052 = vrot.slane %v1560, 5
        %v2053 = vrot.slane %v2052, 4
        %v2054 = vrot.slane %v1561, 5
        %v2055 = vsel %vm715, %v2053, %v2054
        %v2056 = vrot.slane %v2054, 4
        %v2057 = vrot.slane %v1562, 5
        %v2058 = vsel %vm715, %v2056, %v2057
        %v2059 = vrot.slane %v1563, 5
        %v2060 = vrot.slane %v2059, 4
        %v2061 = vrot.slane %v1564, 5
        %v2062 = vsel %vm715, %v2060, %v2061
        %v2063 = vrot.slane %v2061, 4
        %v2064 = vrot.slane %v1565, 5
        %v2065 = vsel %vm715, %v2063, %v2064
        %v2066 = vrot.slane %v1566, 5
        %v2067 = vrot.slane %v2066, 4
        %v2068 = vrot.slane %v1567, 5
        %v2069 = vsel %vm715, %v2067, %v2068
        %v2070 = vrot.slane %v2068, 4
        %v2071 = vrot.slane %v1568, 5
        %v2072 = vsel %vm715, %v2070, %v2071
        %v2073 = vrot.slane %v1569, 5
        %v2074 = vrot.slane %v2073, 4
        %v2075 = vrot.slane %v1570, 5
        %v2076 = vsel %vm715, %v2074, %v2075
        %v2077 = vrot.slane %v2075, 4
        %v2078 = vrot.slane %v1571, 5
        %v2079 = vsel %vm715, %v2077, %v2078
        %s2080 = scalar_lea.vmem %s219, 16
        %v2081 = vld [vmem:[%s2080] sm:$0x3]
        %v2082 = vunpack.c.l.b16 %v2027
        %v2083 = vunpack.c.l.b16 %v2030
        %v2084 = vunpack.c.l.b16 %v2034
        %v2085 = vunpack.c.l.b16 %v2037
        %v2086 = vunpack.c.l.b16 %v2041
        %v2087 = vunpack.c.l.b16 %v2044
        %v2088 = vunpack.c.l.b16 %v2048
        %v2089 = vunpack.c.l.b16 %v2051
        %v2090 = vunpack.c.l.b16 %v2055
        %v2091 = vunpack.c.l.b16 %v2058
        %v2092 = vunpack.c.l.b16 %v2062
        %v2093 = vunpack.c.l.b16 %v2065
        %v2094 = vunpack.c.l.b16 %v2069
        %v2095 = vunpack.c.l.b16 %v2072
        %v2096 = vunpack.c.l.b16 %v2076
        %v2097 = vunpack.c.l.b16 %v2079
        %v2098 = vpack.c.b16 %v2083, %v2082
        %v2099 = vpack.c.b16 %v2085, %v2084
        %v2100 = vpack.c.b16 %v2087, %v2086
        %v2101 = vpack.c.b16 %v2089, %v2088
        %v2102 = vpack.c.b16 %v2091, %v2090
        %v2103 = vpack.c.b16 %v2093, %v2092
        %v2104 = vpack.c.b16 %v2095, %v2094
        %v2105 = vpack.c.b16 %v2097, %v2096
        %v2107 = vsel %vm298, %v2098, 0
        %v2110 = vsel %vm298, %v2099, 0
        %v2113 = vsel %vm298, %v2100, 0
        %v2116 = vsel %vm298, %v2101, 0
        %v2119 = vsel %vm298, %v2102, 0
        %v2122 = vsel %vm298, %v2103, 0
        %v2125 = vsel %vm298, %v2104, 0
        %v2128 = vsel %vm298, %v2105, 0
        %v2131 = vsel %vm323, %v2081, 0
        %2133 = vmatpush.bf16.msra.mxu0 0
        %2134 = vmatpush.bf16.msra.mxu0 0
        %2135 = vmatpush.bf16.msra.mxu0 0
        %2136 = vmatpush.bf16.msra.mxu0 0
        %2137 = vmatpush.bf16.msra.mxu0 0
        %2138 = vmatpush.bf16.msra.mxu0 0
        %2139 = vmatpush.bf16.msra.mxu0 0
        %2140 = vmatpush.bf16.msra.mxu0 %v2131
        %2141 = vmatmul.bf16.gmra.mxu0 %v2107
        %v2142 = vpop.f32.mrf.mxu0
        %v2143 = vadd.f32 0.0, %v2142
        %v2144 = vpop.f32.mrf.mxu0
        %v2145 = vadd.f32 0.0, %v2144
        %2146 = vmatmul.bf16.gmra.mxu0 %v2110
        %v2147 = vpop.f32.mrf.mxu0
        %v2148 = vadd.f32 0.0, %v2147
        %v2149 = vpop.f32.mrf.mxu0
        %v2150 = vadd.f32 0.0, %v2149
        %2151 = vmatmul.bf16.gmra.mxu0 %v2113
        %v2152 = vpop.f32.mrf.mxu0
        %v2153 = vadd.f32 0.0, %v2152
        %v2154 = vpop.f32.mrf.mxu0
        %v2155 = vadd.f32 0.0, %v2154
        %2156 = vmatmul.bf16.gmra.mxu0 %v2116
        %v2157 = vpop.f32.mrf.mxu0
        %v2158 = vadd.f32 0.0, %v2157
        %v2159 = vpop.f32.mrf.mxu0
        %v2160 = vadd.f32 0.0, %v2159
        %2161 = vmatmul.bf16.gmra.mxu0 %v2119
        %v2162 = vpop.f32.mrf.mxu0
        %v2163 = vadd.f32 0.0, %v2162
        %v2164 = vpop.f32.mrf.mxu0
        %v2165 = vadd.f32 0.0, %v2164
        %2166 = vmatmul.bf16.gmra.mxu0 %v2122
        %v2167 = vpop.f32.mrf.mxu0
        %v2168 = vadd.f32 0.0, %v2167
        %v2169 = vpop.f32.mrf.mxu0
        %v2170 = vadd.f32 0.0, %v2169
        %2171 = vmatmul.bf16.gmra.mxu0 %v2125
        %v2172 = vpop.f32.mrf.mxu0
        %v2173 = vadd.f32 0.0, %v2172
        %v2174 = vpop.f32.mrf.mxu0
        %v2175 = vadd.f32 0.0, %v2174
        %2176 = vmatmul.bf16.gmra.mxu0 %v2128
        %v2177 = vpop.f32.mrf.mxu0
        %v2178 = vadd.f32 0.0, %v2177
        %v2179 = vpop.f32.mrf.mxu0
        %v2180 = vadd.f32 0.0, %v2179
        %2181 = vdwg.mxu0
        %v2182 = vadd.f32 %v2000, %v2143
        %v2183 = vadd.f32 %v2001, %v2145
        %v2184 = vadd.f32 %v2002, %v2148
        %v2185 = vadd.f32 %v2003, %v2150
        %v2186 = vadd.f32 %v2004, %v2153
        %v2187 = vadd.f32 %v2005, %v2155
        %v2188 = vadd.f32 %v2006, %v2158
        %v2189 = vadd.f32 %v2007, %v2160
        %v2190 = vadd.f32 %v2008, %v2163
        %v2191 = vadd.f32 %v2009, %v2165
        %v2192 = vadd.f32 %v2010, %v2168
        %v2193 = vadd.f32 %v2011, %v2170
        %v2194 = vadd.f32 %v2012, %v2173
        %v2195 = vadd.f32 %v2013, %v2175
        %v2196 = vadd.f32 %v2014, %v2178
        %v2197 = vadd.f32 %v2015, %v2180
        %2198 = vst [vmem:[%s210] sm:$0xff] %v2182
        %2199 = vst [vmem:[%s210 + $0x8] sm:$0xff] %v2183
        %2200 = vst [vmem:[%s210 + $0x10] sm:$0xff] %v2184
        %2201 = vst [vmem:[%s210 + $0x18] sm:$0xff] %v2185
        %2202 = vst [vmem:[%s210 + $0x20] sm:$0xff] %v2186
        %2203 = vst [vmem:[%s210 + $0x28] sm:$0xff] %v2187
        %2204 = vst [vmem:[%s210 + $0x30] sm:$0xff] %v2188
        %2205 = vst [vmem:[%s210 + $0x38] sm:$0xff] %v2189
        %2206 = vst [vmem:[%s210 + $0x40] sm:$0xff] %v2190
        %2207 = vst [vmem:[%s210 + $0x48] sm:$0xff] %v2191
        %2208 = vst [vmem:[%s210 + $0x50] sm:$0xff] %v2192
        %2209 = vst [vmem:[%s210 + $0x58] sm:$0xff] %v2193
        %2210 = vst [vmem:[%s210 + $0x60] sm:$0xff] %v2194
        %2211 = vst [vmem:[%s210 + $0x68] sm:$0xff] %v2195
        %2212 = vst [vmem:[%s210 + $0x70] sm:$0xff] %v2196
        %2213 = vst [vmem:[%s210 + $0x78] sm:$0xff] %v2197
        %s2214 = sand.u32 %s126, 1
        %s2215 = scalar_lea.sflag [#allocation3], %s2214
        %s2216 = sand.u32 %s126, 1
        %s2217 = smul.addr %s2216, 128
        %s2218 = scalar_lea.vmem [#allocation2], %s2217
        // Predicated region
        $region33: #{tpu_custom_call.1} parent=31 // pred_check
          %p2219 = pneg %p136
        $region34: #{tpu_custom_call.1} parent=31 // pred_check_branch
          %2221 = sbr.rel (%p2219) target = $region36
        $region35: #{tpu_custom_call.1} parent=31 // pred_region
          %s2222 = smul.u32 8, %s23
          %2224 = vsyncadd %s2215, 0
          %s2225 = smul.addr %s2222, 2
          %s2226 = sadd.s32 %s24, %s2225
          %s2227 = smul.addr %s22, 32
          %s2228 = sadd.s32 %s2226, %s2227
          %s2229 = smul.addr %s2228, 8
          %s2230 = scalar_lea.hbm %s3, %s2229
          %s2231 = sshll.u32 %s2218, 4
          %s2232 = int_to_ptr.vmem [resolvable:$true] %s2231
          %s2233 = sshll.u32 %s2230, 4
          %s2234 = int_to_ptr.hbm [resolvable:$true] %s2233
          %2239 = dma.vmem_to_hbm [thread:$0]  %s2232, 2048, %s2234, %s2215, 128, 128, 8
        $region36: #{tpu_custom_call.1} parent=31 // pred_fallthru
          _
      $region32: #{tpu_custom_call.1} parent=5 // pred_fallthru
        _
      %p2240 = scmp.le.s32.totalorder 2, %s12
      // Predicated region
      $region37: #{tpu_custom_call.1} parent=5 // pred_check
        %p2241 = pneg %p2240
      $region38: #{tpu_custom_call.1} parent=5 // pred_check_branch
        %2243 = sbr.rel (%p2241) target = $region40
      $region39: #{tpu_custom_call.1} parent=5 // pred_region
        %s2244 = ssub.s32 %s12, 2
        // Predicated region
        $region41: #{tpu_custom_call.1} parent=39 // pred_check
          %p2245 = pneg %p142
        $region42: #{tpu_custom_call.1} parent=39 // pred_check_branch
          %2247 = sbr.rel (%p2245) target = $region44
        $region43: #{tpu_custom_call.1} parent=39 // pred_region
          %s2248 = sand.u32 %s127, 1
          %s2249 = scalar_lea.sflag [#allocation3], %s2248
          %s2250 = sand.u32 %s127, 1
          %s2251 = smul.addr %s2250, 128
          %s2252 = scalar_lea.vmem [#allocation2], %s2251
          %2254 = dma.done %s2249, 2048
        $region44: #{tpu_custom_call.1} parent=39 // pred_fallthru
          _
      $region40: #{tpu_custom_call.1} parent=5 // pred_fallthru
        _
    $region6: #{tpu_custom_call.1} parent=1 // loop_footer
      %s16 = sadd.s32 1, %s12
    $region7: #{tpu_custom_call.1} parent=1 // loop_footer_branch
      %11 = sbr.rel target = $region3
    $region8: #{tpu_custom_call.1} parent=1 // loop_exit
      _
    %2255 = vsyncpa [#allocation3], 1
    %s2256 = scalar_lea.sflag [#allocation3], 1
    %2257 = vsyncpa %s2256, 1

</llo_original>
